<compile_context>
chip_gen: v6e
topology: v6e:2x2x1
jax: 0.10.0
libtpu: 0.0.40
codegen_flags: <defaults>
</compile_context>

<pallas_src>
import jax
import jax.numpy as jnp
from jax.experimental import pallas as pl
from jax.experimental.pallas import tpu as pltpu

# ---- model hyper-params (args.dim, args.L, args.H) and small sizes ----------
DIM = 32          # args.dim
L = 2             # args.L  (number of cross-compress / low layers)
H = 2             # args.H  (number of high layers)
B = 16            # batch (two 8-row tiles -> 2 "parallel" grid points)
N_USER = 10
N_ITEM = 12
N_ENTITY = 20
N_RELATION = 5


# -----------------------------------------------------------------------------
# in-kernel helpers
# -----------------------------------------------------------------------------
def _gather(idx, table_ref):
    """Row gather via one-hot matmul (tables are tiny, lives on the MXU)."""
    n = table_ref.shape[0]
    iota = jax.lax.broadcasted_iota(jnp.int32, (idx.shape[0], n), 1)
    onehot = (iota == idx).astype(jnp.float32)              # [TB, n]
    return jnp.dot(onehot, table_ref[...],
                   preferred_element_type=jnp.float32)      # [TB, DIM]


def _dense(x, w, b):
    """Dense layer: relu(x @ W + b)."""
    return jnp.maximum(
        jnp.dot(x, w, preferred_element_type=jnp.float32) + b, 0.0)


# -----------------------------------------------------------------------------
# fused RS + KGE kernel (one batch tile per grid step)
# -----------------------------------------------------------------------------
def mkr_fused_kernel(uidx_ref, iidx_ref, hidx_ref, ridx_ref, tidx_ref,
                     ut_ref, it_ref, et_ref, rt_ref,
                     ccw_ref, ccb_ref, umw_ref, umb_ref, tmw_ref, tmb_ref,
                     kgw_ref, kgb_ref, kpw_ref, kpb_ref,
                     emb_ref, scal_ref):
    # -------- in-kernel embedding lookups --------
    u = _gather(uidx_ref[...], ut_ref)      # user      [TB, DIM]
    v = _gather(iidx_ref[...], it_ref)      # item      [TB, DIM]
    e = _gather(hidx_ref[...], et_ref)      # head      [TB, DIM]
    t = _gather(tidx_ref[...], et_ref)      # tail      [TB, DIM]
    r = _gather(ridx_ref[...], rt_ref)      # relation  [TB, DIM]

    # -------- shared cross-compress stack + user/tail Dense towers --------
    for l in range(L):
        w4 = ccw_ref[l]                     # [DIM, 4]: cols = [vv, ev, ve, ee]
        cb = ccb_ref[l]                     # [2, DIM]: rows = [b_v, b_e]
        e_proj = jnp.dot(e, w4, preferred_element_type=jnp.float32)  # [TB, 4]
        v_proj = jnp.dot(v, w4, preferred_element_type=jnp.float32)  # [TB, 4]
        v_new = v * e_proj[:, 0:1] + e * v_proj[:, 1:2] + cb[0:1, :]
        e_new = v * e_proj[:, 2:3] + e * v_proj[:, 3:4] + cb[1:2, :]
        v, e = v_new, e_new
        u = _dense(u, umw_ref[l], umb_ref[l])
        t = _dense(t, tmw_ref[l], tmb_ref[l])

    # -------- RS branch (inner product) --------
    scores = jnp.sum(u * v, axis=1, keepdims=True)           # [TB, 1]
    scores_norm = jax.nn.sigmoid(scores)

    # -------- KGE branch --------
    # concat([e, r], 1) @ W  computed as a split matmul (no lane concat needed)
    def first_dense(w_top, w_bot, b):
        y = (jnp.dot(e, w_top, preferred_element_type=jnp.float32)
             + jnp.dot(r, w_bot, preferred_element_type=jnp.float32) + b)
        return jnp.maximum(y, 0.0)

    if H - 1 > 0:
        kg0 = kgw_ref[0]                                     # [2*DIM, 2*DIM]
        hr = first_dense(kg0[0:DIM, :], kg0[DIM:2 * DIM, :], kgb_ref[0])
        for h in range(1, H - 1):
            hr = _dense(hr, kgw_ref[h], kgb_ref[h])
        tail_pred = _dense(hr, kpw_ref[...], kpb_ref[...])   # [TB, DIM]
    else:
        tail_pred = first_dense(kpw_ref[0:DIM, :], kpw_ref[DIM:2 * DIM, :],
                                kpb_ref[...])

    tail_pred = jax.nn.sigmoid(tail_pred)
    scores_kge = jax.nn.sigmoid(jnp.sum(t * tail_pred, axis=1, keepdims=True))
    rmse_per_ex = jnp.sqrt(
        jnp.sum((t - tail_pred) ** 2, axis=1, keepdims=True) / DIM)  # [TB, 1]

    # -------- lane-dense packed outputs (one full-width store each) --------
    # embedding slab: [TB, 4*DIM] = user | item | head | tail
    emb_ref[...] = jnp.concatenate([u, v, e, t], axis=1)
    # scalar slab: [TB, 8] = scores | scores_norm | scores_kge | rmse | 0s
    col = jax.lax.broadcasted_iota(jnp.int32, scal_ref.shape, 1)
    scal_ref[...] = (jnp.where(col == 0, scores, 0.0)
                     + jnp.where(col == 1, scores_norm, 0.0)
                     + jnp.where(col == 2, scores_kge, 0.0)
                     + jnp.where(col == 3, rmse_per_ex, 0.0))


# -----------------------------------------------------------------------------
# wrapper: one fused pallas_call computing both branches
# -----------------------------------------------------------------------------
_WEIGHT_KEYS = ("user_table", "item_table", "entity_table", "relation_table",
                "cc_w", "cc_b", "um_w", "um_b", "tm_w", "tm_b",
                "kg_w", "kg_b", "kp_w", "kp_b")


def _fused_forward(params, user_idx, item_idx, head_idx, rel_idx, tail_idx):
    bsz = item_idx.shape[0]
    tb = 8 if bsz % 8 == 0 else bsz
    grid = (bsz // tb,)

    def as_col(a):
        return jnp.asarray(a, jnp.int32).reshape(bsz, 1)

    idx_spec = pl.BlockSpec((tb, 1), lambda i: (i, 0))

    def full_spec(arr):
        nd = arr.ndim
        return pl.BlockSpec(arr.shape, lambda i, _nd=nd: (0,) * _nd)

    weights = [params[k] for k in _WEIGHT_KEYS]

    emb, scal = pl.pallas_call(
        mkr_fused_kernel,
        out_shape=(jax.ShapeDtypeStruct((bsz, 4 * DIM), jnp.float32),
                   jax.ShapeDtypeStruct((bsz, 8), jnp.float32)),
        grid_spec=pltpu.PrefetchScalarGridSpec(
            num_scalar_prefetch=0,
            grid=grid,
            in_specs=[idx_spec] * 5 + [full_spec(w) for w in weights],
            out_specs=(pl.BlockSpec((tb, 4 * DIM), lambda i: (i, 0)),
                       pl.BlockSpec((tb, 8), lambda i: (i, 0))),
        ),
        compiler_params=pltpu.CompilerParams(
            dimension_semantics=("parallel",)),
    )(as_col(user_idx), as_col(item_idx), as_col(head_idx),
      as_col(rel_idx), as_col(tail_idx), *weights)

    u_e = emb[:, 0 * DIM:1 * DIM]
    v_e = emb[:, 1 * DIM:2 * DIM]
    h_e = emb[:, 2 * DIM:3 * DIM]
    t_e = emb[:, 3 * DIM:4 * DIM]
    scores = scal[:, 0]
    scores_norm = scal[:, 1]
    scores_kge = scal[:, 2]
    rmse = jnp.mean(scal[:, 3])          # per-example partials -> batch mean
    rs_outputs = [u_e, v_e, scores, scores_norm]
    kge_outputs = [h_e, t_e, scores_kge, rmse]
    return rs_outputs, kge_outputs


def mkr_forward(params, user_indices=None, item_indices=None,
                head_indices=None, relation_indices=None, tail_indices=None):
    """Mirrors MKR_model.forward branching (use_inner_product=True)."""
    bsz = item_indices.shape[0]
    dummy = jnp.zeros((bsz,), jnp.int32)
    uidx = user_indices if user_indices is not None else dummy
    ridx = relation_indices if relation_indices is not None else dummy
    tidx = tail_indices if tail_indices is not None else dummy
    rs_out, kge_out = _fused_forward(params, uidx, item_indices, head_indices,
                                     ridx, tidx)
    # same "last branch wins" return semantics as the PyTorch module
    if relation_indices is not None:
        return kge_out
    return rs_out


def mkr_forward_both(params, user_indices, item_indices, head_indices,
                     relation_indices, tail_indices):
    """Fused path: both RS and KGE outputs from a single kernel launch."""
    return _fused_forward(params, user_indices, item_indices, head_indices,
                          relation_indices, tail_indices)


# -----------------------------------------------------------------------------
# deterministic parameter init (synthetic, no checkpoint)
# -----------------------------------------------------------------------------
def _pad_rows(x, mult=8):
    pad = (-x.shape[0]) % mult
    if pad:
        x = jnp.concatenate([x, jnp.zeros((pad,) + x.shape[1:], x.dtype)], 0)
    return x


def init_params(key):
    ks = jax.random.split(key, 9)

    def init(k, shape, scale=0.1):
        return (scale * jax.random.normal(k, shape)).astype(jnp.float32)

    return dict(
        # embedding tables, row-padded to a sublane multiple (padding rows
        # are never selected since indices stay in the real range)
        user_table=_pad_rows(init(ks[0], (N_USER, DIM))),
        item_table=_pad_rows(init(ks[1], (N_ITEM, DIM))),
        entity_table=_pad_rows(init(ks[2], (N_ENTITY, DIM))),
        relation_table=_pad_rows(init(ks[3], (N_RELATION, DIM))),
        # CrossCompressUnit: per layer a stacked [DIM, 4] weight, columns
        # ordered [w_vv, w_ev, w_ve, w_ee]; biases [b_v; b_e] per layer
        cc_w=init(ks[4], (L, DIM, 4)),
        cc_b=jnp.zeros((L, 2, DIM), jnp.float32),
        # user_mlp / tail_mlp: L x Dense(DIM, DIM), weights stored [in, out]
        um_w=init(ks[5], (L, DIM, DIM)),
        um_b=jnp.zeros((L, 1, DIM), jnp.float32),
        tm_w=init(ks[6], (L, DIM, DIM)),
        tm_b=jnp.zeros((L, 1, DIM), jnp.float32),
        # kge_mlp: (H-1) x Dense(2*DIM, 2*DIM)
        kg_w=init(ks[7], (H - 1, 2 * DIM, 2 * DIM)),
        kg_b=jnp.zeros((H - 1, 1, 2 * DIM), jnp.float32),
        # kge_pred_mlp: Dense(2*DIM, DIM)
        kp_w=init(ks[8], (2 * DIM, DIM)),
        kp_b=jnp.zeros((1, DIM), jnp.float32),
    )


if __name__ == "__main__":
    key = jax.random.PRNGKey(0)
    pkey, ikey = jax.random.split(key)
    params = init_params(pkey)

    k1, k2, k3, k4, k5 = jax.random.split(ikey, 5)
    user_idx = jax.random.randint(k1, (B,), 0, N_USER)
    item_idx = jax.random.randint(k2, (B,), 0, N_ITEM)
    head_idx = jax.random.randint(k3, (B,), 0, N_ENTITY)
    rel_idx = jax.random.randint(k4, (B,), 0, N_RELATION)
    tail_idx = jax.random.randint(k5, (B,), 0, N_ENTITY)

    # fused path: RS + KGE outputs from one kernel launch on the shared batch
    rs_out, kge_out = mkr_forward_both(params, user_idx, item_idx, head_idx,
                                       rel_idx, tail_idx)
    # module-style branched call (RS phase only), same fused kernel underneath
    rs_only = mkr_forward(params, user_indices=user_idx,
                          item_indices=item_idx, head_indices=head_idx)

    jax.block_until_ready(rs_out)
    jax.block_until_ready(kge_out)
    jax.block_until_ready(rs_only)
    print("KERNEL_OK")
</pallas_src>

<mosaic_0001>
module attributes {stable_mosaic.version = 11 : i64} {
  func.func @mkr_fused_kernel(%arg0: i32, %arg1: memref<8x1xi32, #tpu.memory_space<vmem>>, %arg2: memref<8x1xi32, #tpu.memory_space<vmem>>, %arg3: memref<8x1xi32, #tpu.memory_space<vmem>>, %arg4: memref<8x1xi32, #tpu.memory_space<vmem>>, %arg5: memref<8x1xi32, #tpu.memory_space<vmem>>, %arg6: memref<16x32xf32, #tpu.memory_space<vmem>>, %arg7: memref<16x32xf32, #tpu.memory_space<vmem>>, %arg8: memref<24x32xf32, #tpu.memory_space<vmem>>, %arg9: memref<8x32xf32, #tpu.memory_space<vmem>>, %arg10: memref<2x32x4xf32, #tpu.memory_space<vmem>>, %arg11: memref<2x2x32xf32, #tpu.memory_space<vmem>>, %arg12: memref<2x32x32xf32, #tpu.memory_space<vmem>>, %arg13: memref<2x1x32xf32, #tpu.memory_space<vmem>>, %arg14: memref<2x32x32xf32, #tpu.memory_space<vmem>>, %arg15: memref<2x1x32xf32, #tpu.memory_space<vmem>>, %arg16: memref<1x64x64xf32, #tpu.memory_space<vmem>>, %arg17: memref<1x1x64xf32, #tpu.memory_space<vmem>>, %arg18: memref<64x32xf32, #tpu.memory_space<vmem>>, %arg19: memref<1x32xf32, #tpu.memory_space<vmem>>, %arg20: memref<8x128xf32, #tpu.memory_space<vmem>>, %arg21: memref<8x8xf32, #tpu.memory_space<vmem>>) attributes {dimension_semantics = [#tpu.dimension_semantics<parallel>], iteration_bounds = array<i64: 2>, scalar_prefetch = 0 : i64, scratch_operands = 0 : i64, tpu.core_type = #tpu.core_type<tc>, window_params = [{transform_indices = @transform_0, window_bounds = array<i64: 8, 1>}, {transform_indices = @transform_1, window_bounds = array<i64: 8, 1>}, {transform_indices = @transform_2, window_bounds = array<i64: 8, 1>}, {transform_indices = @transform_3, window_bounds = array<i64: 8, 1>}, {transform_indices = @transform_4, window_bounds = array<i64: 8, 1>}, {pipeline_mode = #tpu.pipeline_mode<synchronous>, transform_indices = @transform_5, window_bounds = array<i64: 16, 32>}, {pipeline_mode = #tpu.pipeline_mode<synchronous>, transform_indices = @transform_6, window_bounds = array<i64: 16, 32>}, {pipeline_mode = #tpu.pipeline_mode<synchronous>, transform_indices = @transform_7, window_bounds = array<i64: 24, 32>}, {pipeline_mode = #tpu.pipeline_mode<synchronous>, transform_indices = @transform_8, window_bounds = array<i64: 8, 32>}, {pipeline_mode = #tpu.pipeline_mode<synchronous>, transform_indices = @transform_9, window_bounds = array<i64: 2, 32, 4>}, {pipeline_mode = #tpu.pipeline_mode<synchronous>, transform_indices = @transform_10, window_bounds = array<i64: 2, 2, 32>}, {pipeline_mode = #tpu.pipeline_mode<synchronous>, transform_indices = @transform_11, window_bounds = array<i64: 2, 32, 32>}, {pipeline_mode = #tpu.pipeline_mode<synchronous>, transform_indices = @transform_12, window_bounds = array<i64: 2, 1, 32>}, {pipeline_mode = #tpu.pipeline_mode<synchronous>, transform_indices = @transform_13, window_bounds = array<i64: 2, 32, 32>}, {pipeline_mode = #tpu.pipeline_mode<synchronous>, transform_indices = @transform_14, window_bounds = array<i64: 2, 1, 32>}, {pipeline_mode = #tpu.pipeline_mode<synchronous>, transform_indices = @transform_15, window_bounds = array<i64: 1, 64, 64>}, {pipeline_mode = #tpu.pipeline_mode<synchronous>, transform_indices = @transform_16, window_bounds = array<i64: 1, 1, 64>}, {pipeline_mode = #tpu.pipeline_mode<synchronous>, transform_indices = @transform_17, window_bounds = array<i64: 64, 32>}, {pipeline_mode = #tpu.pipeline_mode<synchronous>, transform_indices = @transform_18, window_bounds = array<i64: 1, 32>}, {transform_indices = @transform_19, window_bounds = array<i64: 8, 128>}, {transform_indices = @transform_20, window_bounds = array<i64: 8, 8>}]} {
    %c0 = arith.constant 0 : index
    %c0_0 = arith.constant 0 : index
    %0 = vector.load %arg1[%c0, %c0_0] : memref<8x1xi32, #tpu.memory_space<vmem>>, vector<8x1xi32>
    %1 = tpu.iota {dimensions = array<i32: 1>} : vector<8x16xi32>
    %2 = vector.broadcast %0 : vector<8x1xi32> to vector<8x16xi32>
    %3 = arith.cmpi eq, %1, %2 : vector<8x16xi32>
    %4 = arith.extui %3 : vector<8x16xi1> to vector<8x16xi32>
    %5 = arith.sitofp %4 : vector<8x16xi32> to vector<8x16xf32>
    %c0_1 = arith.constant 0 : index
    %c0_2 = arith.constant 0 : index
    %6 = vector.load %arg6[%c0_1, %c0_2] : memref<16x32xf32, #tpu.memory_space<vmem>>, vector<16x32xf32>
    %cst = arith.constant dense<0.000000e+00> : vector<8x32xf32>
    %7 = tpu.matmul %5, %6, %cst {dimension_numbers = #tpu.dot_dimension_numbers<[1], [0], [0], [1], [0, 0, 1, 1], [], []>} : vector<8x16xf32>, vector<16x32xf32>, vector<8x32xf32> -> vector<8x32xf32>
    %c0_3 = arith.constant 0 : index
    %c0_4 = arith.constant 0 : index
    %8 = vector.load %arg2[%c0_3, %c0_4] : memref<8x1xi32, #tpu.memory_space<vmem>>, vector<8x1xi32>
    %9 = tpu.iota {dimensions = array<i32: 1>} : vector<8x16xi32>
    %10 = vector.broadcast %8 : vector<8x1xi32> to vector<8x16xi32>
    %11 = arith.cmpi eq, %9, %10 : vector<8x16xi32>
    %12 = arith.extui %11 : vector<8x16xi1> to vector<8x16xi32>
    %13 = arith.sitofp %12 : vector<8x16xi32> to vector<8x16xf32>
    %c0_5 = arith.constant 0 : index
    %c0_6 = arith.constant 0 : index
    %14 = vector.load %arg7[%c0_5, %c0_6] : memref<16x32xf32, #tpu.memory_space<vmem>>, vector<16x32xf32>
    %cst_7 = arith.constant dense<0.000000e+00> : vector<8x32xf32>
    %15 = tpu.matmul %13, %14, %cst_7 {dimension_numbers = #tpu.dot_dimension_numbers<[1], [0], [0], [1], [0, 0, 1, 1], [], []>} : vector<8x16xf32>, vector<16x32xf32>, vector<8x32xf32> -> vector<8x32xf32>
    %c0_8 = arith.constant 0 : index
    %c0_9 = arith.constant 0 : index
    %16 = vector.load %arg3[%c0_8, %c0_9] : memref<8x1xi32, #tpu.memory_space<vmem>>, vector<8x1xi32>
    %17 = tpu.iota {dimensions = array<i32: 1>} : vector<8x24xi32>
    %18 = vector.broadcast %16 : vector<8x1xi32> to vector<8x24xi32>
    %19 = arith.cmpi eq, %17, %18 : vector<8x24xi32>
    %20 = arith.extui %19 : vector<8x24xi1> to vector<8x24xi32>
    %21 = arith.sitofp %20 : vector<8x24xi32> to vector<8x24xf32>
    %c0_10 = arith.constant 0 : index
    %c0_11 = arith.constant 0 : index
    %22 = vector.load %arg8[%c0_10, %c0_11] : memref<24x32xf32, #tpu.memory_space<vmem>>, vector<24x32xf32>
    %cst_12 = arith.constant dense<0.000000e+00> : vector<8x32xf32>
    %23 = tpu.matmul %21, %22, %cst_12 {dimension_numbers = #tpu.dot_dimension_numbers<[1], [0], [0], [1], [0, 0, 1, 1], [], []>} : vector<8x24xf32>, vector<24x32xf32>, vector<8x32xf32> -> vector<8x32xf32>
    %c0_13 = arith.constant 0 : index
    %c0_14 = arith.constant 0 : index
    %24 = vector.load %arg5[%c0_13, %c0_14] : memref<8x1xi32, #tpu.memory_space<vmem>>, vector<8x1xi32>
    %25 = tpu.iota {dimensions = array<i32: 1>} : vector<8x24xi32>
    %26 = vector.broadcast %24 : vector<8x1xi32> to vector<8x24xi32>
    %27 = arith.cmpi eq, %25, %26 : vector<8x24xi32>
    %28 = arith.extui %27 : vector<8x24xi1> to vector<8x24xi32>
    %29 = arith.sitofp %28 : vector<8x24xi32> to vector<8x24xf32>
    %c0_15 = arith.constant 0 : index
    %c0_16 = arith.constant 0 : index
    %30 = vector.load %arg8[%c0_15, %c0_16] : memref<24x32xf32, #tpu.memory_space<vmem>>, vector<24x32xf32>
    %cst_17 = arith.constant dense<0.000000e+00> : vector<8x32xf32>
    %31 = tpu.matmul %29, %30, %cst_17 {dimension_numbers = #tpu.dot_dimension_numbers<[1], [0], [0], [1], [0, 0, 1, 1], [], []>} : vector<8x24xf32>, vector<24x32xf32>, vector<8x32xf32> -> vector<8x32xf32>
    %c0_18 = arith.constant 0 : index
    %c0_19 = arith.constant 0 : index
    %32 = vector.load %arg4[%c0_18, %c0_19] : memref<8x1xi32, #tpu.memory_space<vmem>>, vector<8x1xi32>
    %33 = tpu.iota {dimensions = array<i32: 1>} : vector<8x8xi32>
    %34 = vector.broadcast %32 : vector<8x1xi32> to vector<8x8xi32>
    %35 = arith.cmpi eq, %33, %34 : vector<8x8xi32>
    %36 = arith.extui %35 : vector<8x8xi1> to vector<8x8xi32>
    %37 = arith.sitofp %36 : vector<8x8xi32> to vector<8x8xf32>
    %c0_20 = arith.constant 0 : index
    %c0_21 = arith.constant 0 : index
    %38 = vector.load %arg9[%c0_20, %c0_21] : memref<8x32xf32, #tpu.memory_space<vmem>>, vector<8x32xf32>
    %cst_22 = arith.constant dense<0.000000e+00> : vector<8x32xf32>
    %39 = tpu.matmul %37, %38, %cst_22 {dimension_numbers = #tpu.dot_dimension_numbers<[1], [0], [0], [1], [0, 0, 1, 1], [], []>} : vector<8x8xf32>, vector<8x32xf32>, vector<8x32xf32> -> vector<8x32xf32>
    %c0_23 = arith.constant 0 : index
    %c0_24 = arith.constant 0 : index
    %c0_25 = arith.constant 0 : index
    %40 = vector.load %arg10[%c0_23, %c0_24, %c0_25] : memref<2x32x4xf32, #tpu.memory_space<vmem>>, vector<1x32x4xf32>
    %41 = vector.shape_cast %40 : vector<1x32x4xf32> to vector<32x4xf32>
    %c0_26 = arith.constant 0 : index
    %c0_27 = arith.constant 0 : index
    %c0_28 = arith.constant 0 : index
    %42 = vector.load %arg11[%c0_26, %c0_27, %c0_28] : memref<2x2x32xf32, #tpu.memory_space<vmem>>, vector<1x2x32xf32>
    %43 = vector.shape_cast %42 : vector<1x2x32xf32> to vector<2x32xf32>
    %cst_29 = arith.constant dense<0.000000e+00> : vector<8x4xf32>
    %44 = tpu.matmul %23, %41, %cst_29 {dimension_numbers = #tpu.dot_dimension_numbers<[1], [0], [0], [1], [0, 0, 1, 1], [], []>} : vector<8x32xf32>, vector<32x4xf32>, vector<8x4xf32> -> vector<8x4xf32>
    %cst_30 = arith.constant dense<0.000000e+00> : vector<8x4xf32>
    %45 = tpu.matmul %15, %41, %cst_30 {dimension_numbers = #tpu.dot_dimension_numbers<[1], [0], [0], [1], [0, 0, 1, 1], [], []>} : vector<8x32xf32>, vector<32x4xf32>, vector<8x4xf32> -> vector<8x4xf32>
    %46 = vector.extract_strided_slice %44 {offsets = [0, 0], sizes = [8, 1], strides = [1, 1]} : vector<8x4xf32> to vector<8x1xf32>
    %47 = vector.broadcast %46 : vector<8x1xf32> to vector<8x32xf32>
    %48 = arith.mulf %15, %47 : vector<8x32xf32>
    %49 = vector.extract_strided_slice %45 {offsets = [0, 1], sizes = [8, 1], strides = [1, 1]} : vector<8x4xf32> to vector<8x1xf32>
    %50 = vector.broadcast %49 : vector<8x1xf32> to vector<8x32xf32>
    %51 = arith.mulf %23, %50 : vector<8x32xf32>
    %52 = arith.addf %48, %51 : vector<8x32xf32>
    %53 = vector.extract_strided_slice %43 {offsets = [0, 0], sizes = [1, 32], strides = [1, 1]} : vector<2x32xf32> to vector<1x32xf32>
    %54 = vector.broadcast %53 : vector<1x32xf32> to vector<8x32xf32>
    %55 = arith.addf %52, %54 : vector<8x32xf32>
    %56 = vector.extract_strided_slice %44 {offsets = [0, 2], sizes = [8, 1], strides = [1, 1]} : vector<8x4xf32> to vector<8x1xf32>
    %57 = vector.broadcast %56 : vector<8x1xf32> to vector<8x32xf32>
    %58 = arith.mulf %15, %57 : vector<8x32xf32>
    %59 = vector.extract_strided_slice %45 {offsets = [0, 3], sizes = [8, 1], strides = [1, 1]} : vector<8x4xf32> to vector<8x1xf32>
    %60 = vector.broadcast %59 : vector<8x1xf32> to vector<8x32xf32>
    %61 = arith.mulf %23, %60 : vector<8x32xf32>
    %62 = arith.addf %58, %61 : vector<8x32xf32>
    %63 = vector.extract_strided_slice %43 {offsets = [1, 0], sizes = [1, 32], strides = [1, 1]} : vector<2x32xf32> to vector<1x32xf32>
    %64 = vector.broadcast %63 : vector<1x32xf32> to vector<8x32xf32>
    %65 = arith.addf %62, %64 : vector<8x32xf32>
    %c0_31 = arith.constant 0 : index
    %c0_32 = arith.constant 0 : index
    %c0_33 = arith.constant 0 : index
    %66 = vector.load %arg12[%c0_31, %c0_32, %c0_33] : memref<2x32x32xf32, #tpu.memory_space<vmem>>, vector<1x32x32xf32>
    %67 = vector.shape_cast %66 : vector<1x32x32xf32> to vector<32x32xf32>
    %c0_34 = arith.constant 0 : index
    %c0_35 = arith.constant 0 : index
    %c0_36 = arith.constant 0 : index
    %68 = vector.load %arg13[%c0_34, %c0_35, %c0_36] : memref<2x1x32xf32, #tpu.memory_space<vmem>>, vector<1x1x32xf32>
    %69 = vector.shape_cast %68 : vector<1x1x32xf32> to vector<1x32xf32>
    %cst_37 = arith.constant dense<0.000000e+00> : vector<8x32xf32>
    %70 = tpu.matmul %7, %67, %cst_37 {dimension_numbers = #tpu.dot_dimension_numbers<[1], [0], [0], [1], [0, 0, 1, 1], [], []>} : vector<8x32xf32>, vector<32x32xf32>, vector<8x32xf32> -> vector<8x32xf32>
    %71 = vector.broadcast %69 : vector<1x32xf32> to vector<8x32xf32>
    %72 = arith.addf %70, %71 : vector<8x32xf32>
    %cst_38 = arith.constant 0.000000e+00 : f32
    %73 = vector.broadcast %cst_38 : f32 to vector<8x32xf32>
    %74 = arith.maximumf %72, %73 : vector<8x32xf32>
    %c0_39 = arith.constant 0 : index
    %c0_40 = arith.constant 0 : index
    %c0_41 = arith.constant 0 : index
    %75 = vector.load %arg14[%c0_39, %c0_40, %c0_41] : memref<2x32x32xf32, #tpu.memory_space<vmem>>, vector<1x32x32xf32>
    %76 = vector.shape_cast %75 : vector<1x32x32xf32> to vector<32x32xf32>
    %c0_42 = arith.constant 0 : index
    %c0_43 = arith.constant 0 : index
    %c0_44 = arith.constant 0 : index
    %77 = vector.load %arg15[%c0_42, %c0_43, %c0_44] : memref<2x1x32xf32, #tpu.memory_space<vmem>>, vector<1x1x32xf32>
    %78 = vector.shape_cast %77 : vector<1x1x32xf32> to vector<1x32xf32>
    %cst_45 = arith.constant dense<0.000000e+00> : vector<8x32xf32>
    %79 = tpu.matmul %31, %76, %cst_45 {dimension_numbers = #tpu.dot_dimension_numbers<[1], [0], [0], [1], [0, 0, 1, 1], [], []>} : vector<8x32xf32>, vector<32x32xf32>, vector<8x32xf32> -> vector<8x32xf32>
    %80 = vector.broadcast %78 : vector<1x32xf32> to vector<8x32xf32>
    %81 = arith.addf %79, %80 : vector<8x32xf32>
    %cst_46 = arith.constant 0.000000e+00 : f32
    %82 = vector.broadcast %cst_46 : f32 to vector<8x32xf32>
    %83 = arith.maximumf %81, %82 : vector<8x32xf32>
    %c1 = arith.constant 1 : index
    %c0_47 = arith.constant 0 : index
    %c0_48 = arith.constant 0 : index
    %84 = vector.load %arg10[%c1, %c0_47, %c0_48] : memref<2x32x4xf32, #tpu.memory_space<vmem>>, vector<1x32x4xf32>
    %85 = vector.shape_cast %84 : vector<1x32x4xf32> to vector<32x4xf32>
    %c1_49 = arith.constant 1 : index
    %c0_50 = arith.constant 0 : index
    %c0_51 = arith.constant 0 : index
    %86 = vector.load %arg11[%c1_49, %c0_50, %c0_51] : memref<2x2x32xf32, #tpu.memory_space<vmem>>, vector<1x2x32xf32>
    %87 = vector.shape_cast %86 : vector<1x2x32xf32> to vector<2x32xf32>
    %cst_52 = arith.constant dense<0.000000e+00> : vector<8x4xf32>
    %88 = tpu.matmul %65, %85, %cst_52 {dimension_numbers = #tpu.dot_dimension_numbers<[1], [0], [0], [1], [0, 0, 1, 1], [], []>} : vector<8x32xf32>, vector<32x4xf32>, vector<8x4xf32> -> vector<8x4xf32>
    %cst_53 = arith.constant dense<0.000000e+00> : vector<8x4xf32>
    %89 = tpu.matmul %55, %85, %cst_53 {dimension_numbers = #tpu.dot_dimension_numbers<[1], [0], [0], [1], [0, 0, 1, 1], [], []>} : vector<8x32xf32>, vector<32x4xf32>, vector<8x4xf32> -> vector<8x4xf32>
    %90 = vector.extract_strided_slice %88 {offsets = [0, 0], sizes = [8, 1], strides = [1, 1]} : vector<8x4xf32> to vector<8x1xf32>
    %91 = vector.broadcast %90 : vector<8x1xf32> to vector<8x32xf32>
    %92 = arith.mulf %55, %91 : vector<8x32xf32>
    %93 = vector.extract_strided_slice %89 {offsets = [0, 1], sizes = [8, 1], strides = [1, 1]} : vector<8x4xf32> to vector<8x1xf32>
    %94 = vector.broadcast %93 : vector<8x1xf32> to vector<8x32xf32>
    %95 = arith.mulf %65, %94 : vector<8x32xf32>
    %96 = arith.addf %92, %95 : vector<8x32xf32>
    %97 = vector.extract_strided_slice %87 {offsets = [0, 0], sizes = [1, 32], strides = [1, 1]} : vector<2x32xf32> to vector<1x32xf32>
    %98 = vector.broadcast %97 : vector<1x32xf32> to vector<8x32xf32>
    %99 = arith.addf %96, %98 : vector<8x32xf32>
    %100 = vector.extract_strided_slice %88 {offsets = [0, 2], sizes = [8, 1], strides = [1, 1]} : vector<8x4xf32> to vector<8x1xf32>
    %101 = vector.broadcast %100 : vector<8x1xf32> to vector<8x32xf32>
    %102 = arith.mulf %55, %101 : vector<8x32xf32>
    %103 = vector.extract_strided_slice %89 {offsets = [0, 3], sizes = [8, 1], strides = [1, 1]} : vector<8x4xf32> to vector<8x1xf32>
    %104 = vector.broadcast %103 : vector<8x1xf32> to vector<8x32xf32>
    %105 = arith.mulf %65, %104 : vector<8x32xf32>
    %106 = arith.addf %102, %105 : vector<8x32xf32>
    %107 = vector.extract_strided_slice %87 {offsets = [1, 0], sizes = [1, 32], strides = [1, 1]} : vector<2x32xf32> to vector<1x32xf32>
    %108 = vector.broadcast %107 : vector<1x32xf32> to vector<8x32xf32>
    %109 = arith.addf %106, %108 : vector<8x32xf32>
    %c1_54 = arith.constant 1 : index
    %c0_55 = arith.constant 0 : index
    %c0_56 = arith.constant 0 : index
    %110 = vector.load %arg12[%c1_54, %c0_55, %c0_56] : memref<2x32x32xf32, #tpu.memory_space<vmem>>, vector<1x32x32xf32>
    %111 = vector.shape_cast %110 : vector<1x32x32xf32> to vector<32x32xf32>
    %c1_57 = arith.constant 1 : index
    %c0_58 = arith.constant 0 : index
    %c0_59 = arith.constant 0 : index
    %112 = vector.load %arg13[%c1_57, %c0_58, %c0_59] : memref<2x1x32xf32, #tpu.memory_space<vmem>>, vector<1x1x32xf32>
    %113 = vector.shape_cast %112 : vector<1x1x32xf32> to vector<1x32xf32>
    %cst_60 = arith.constant dense<0.000000e+00> : vector<8x32xf32>
    %114 = tpu.matmul %74, %111, %cst_60 {dimension_numbers = #tpu.dot_dimension_numbers<[1], [0], [0], [1], [0, 0, 1, 1], [], []>} : vector<8x32xf32>, vector<32x32xf32>, vector<8x32xf32> -> vector<8x32xf32>
    %115 = vector.broadcast %113 : vector<1x32xf32> to vector<8x32xf32>
    %116 = arith.addf %114, %115 : vector<8x32xf32>
    %cst_61 = arith.constant 0.000000e+00 : f32
    %117 = vector.broadcast %cst_61 : f32 to vector<8x32xf32>
    %118 = arith.maximumf %116, %117 : vector<8x32xf32>
    %c1_62 = arith.constant 1 : index
    %c0_63 = arith.constant 0 : index
    %c0_64 = arith.constant 0 : index
    %119 = vector.load %arg14[%c1_62, %c0_63, %c0_64] : memref<2x32x32xf32, #tpu.memory_space<vmem>>, vector<1x32x32xf32>
    %120 = vector.shape_cast %119 : vector<1x32x32xf32> to vector<32x32xf32>
    %c1_65 = arith.constant 1 : index
    %c0_66 = arith.constant 0 : index
    %c0_67 = arith.constant 0 : index
    %121 = vector.load %arg15[%c1_65, %c0_66, %c0_67] : memref<2x1x32xf32, #tpu.memory_space<vmem>>, vector<1x1x32xf32>
    %122 = vector.shape_cast %121 : vector<1x1x32xf32> to vector<1x32xf32>
    %cst_68 = arith.constant dense<0.000000e+00> : vector<8x32xf32>
    %123 = tpu.matmul %83, %120, %cst_68 {dimension_numbers = #tpu.dot_dimension_numbers<[1], [0], [0], [1], [0, 0, 1, 1], [], []>} : vector<8x32xf32>, vector<32x32xf32>, vector<8x32xf32> -> vector<8x32xf32>
    %124 = vector.broadcast %122 : vector<1x32xf32> to vector<8x32xf32>
    %125 = arith.addf %123, %124 : vector<8x32xf32>
    %cst_69 = arith.constant 0.000000e+00 : f32
    %126 = vector.broadcast %cst_69 : f32 to vector<8x32xf32>
    %127 = arith.maximumf %125, %126 : vector<8x32xf32>
    %128 = arith.mulf %118, %99 : vector<8x32xf32>
    %cst_70 = arith.constant dense<0.000000e+00> : vector<8xf32>
    %129 = vector.multi_reduction <add>, %128, %cst_70 [1] : vector<8x32xf32> to vector<8xf32>
    %130 = vector.shape_cast %129 : vector<8xf32> to vector<8x1xf32>
    %131 = arith.negf %130 : vector<8x1xf32>
    %132 = math.exp %131 : vector<8x1xf32>
    %cst_71 = arith.constant 1.000000e+00 : f32
    %133 = vector.broadcast %cst_71 : f32 to vector<8x1xf32>
    %134 = arith.addf %133, %132 : vector<8x1xf32>
    %135 = arith.divf %133, %134 : vector<8x1xf32>
    %c0_72 = arith.constant 0 : index
    %c0_73 = arith.constant 0 : index
    %c0_74 = arith.constant 0 : index
    %136 = vector.load %arg16[%c0_72, %c0_73, %c0_74] : memref<1x64x64xf32, #tpu.memory_space<vmem>>, vector<1x64x64xf32>
    %137 = vector.shape_cast %136 : vector<1x64x64xf32> to vector<64x64xf32>
    %138 = vector.extract_strided_slice %137 {offsets = [0, 0], sizes = [32, 64], strides = [1, 1]} : vector<64x64xf32> to vector<32x64xf32>
    %139 = vector.extract_strided_slice %137 {offsets = [32, 0], sizes = [32, 64], strides = [1, 1]} : vector<64x64xf32> to vector<32x64xf32>
    %c0_75 = arith.constant 0 : index
    %c0_76 = arith.constant 0 : index
    %c0_77 = arith.constant 0 : index
    %140 = vector.load %arg17[%c0_75, %c0_76, %c0_77] : memref<1x1x64xf32, #tpu.memory_space<vmem>>, vector<1x1x64xf32>
    %141 = vector.shape_cast %140 : vector<1x1x64xf32> to vector<1x64xf32>
    %cst_78 = arith.constant dense<0.000000e+00> : vector<8x64xf32>
    %142 = tpu.matmul %109, %138, %cst_78 {dimension_numbers = #tpu.dot_dimension_numbers<[1], [0], [0], [1], [0, 0, 1, 1], [], []>} : vector<8x32xf32>, vector<32x64xf32>, vector<8x64xf32> -> vector<8x64xf32>
    %cst_79 = arith.constant dense<0.000000e+00> : vector<8x64xf32>
    %143 = tpu.matmul %39, %139, %cst_79 {dimension_numbers = #tpu.dot_dimension_numbers<[1], [0], [0], [1], [0, 0, 1, 1], [], []>} : vector<8x32xf32>, vector<32x64xf32>, vector<8x64xf32> -> vector<8x64xf32>
    %144 = arith.addf %142, %143 : vector<8x64xf32>
    %145 = vector.broadcast %141 : vector<1x64xf32> to vector<8x64xf32>
    %146 = arith.addf %144, %145 : vector<8x64xf32>
    %cst_80 = arith.constant 0.000000e+00 : f32
    %147 = vector.broadcast %cst_80 : f32 to vector<8x64xf32>
    %148 = arith.maximumf %146, %147 : vector<8x64xf32>
    %c0_81 = arith.constant 0 : index
    %c0_82 = arith.constant 0 : index
    %149 = vector.load %arg18[%c0_81, %c0_82] : memref<64x32xf32, #tpu.memory_space<vmem>>, vector<64x32xf32>
    %c0_83 = arith.constant 0 : index
    %c0_84 = arith.constant 0 : index
    %150 = vector.load %arg19[%c0_83, %c0_84] : memref<1x32xf32, #tpu.memory_space<vmem>>, vector<1x32xf32>
    %cst_85 = arith.constant dense<0.000000e+00> : vector<8x32xf32>
    %151 = tpu.matmul %148, %149, %cst_85 {dimension_numbers = #tpu.dot_dimension_numbers<[1], [0], [0], [1], [0, 0, 1, 1], [], []>} : vector<8x64xf32>, vector<64x32xf32>, vector<8x32xf32> -> vector<8x32xf32>
    %152 = vector.broadcast %150 : vector<1x32xf32> to vector<8x32xf32>
    %153 = arith.addf %151, %152 : vector<8x32xf32>
    %cst_86 = arith.constant 0.000000e+00 : f32
    %154 = vector.broadcast %cst_86 : f32 to vector<8x32xf32>
    %155 = arith.maximumf %153, %154 : vector<8x32xf32>
    %156 = arith.negf %155 : vector<8x32xf32>
    %157 = math.exp %156 : vector<8x32xf32>
    %cst_87 = arith.constant 1.000000e+00 : f32
    %158 = vector.broadcast %cst_87 : f32 to vector<8x32xf32>
    %159 = arith.addf %158, %157 : vector<8x32xf32>
    %160 = arith.divf %158, %159 : vector<8x32xf32>
    %161 = arith.mulf %127, %160 : vector<8x32xf32>
    %cst_88 = arith.constant dense<0.000000e+00> : vector<8xf32>
    %162 = vector.multi_reduction <add>, %161, %cst_88 [1] : vector<8x32xf32> to vector<8xf32>
    %163 = vector.shape_cast %162 : vector<8xf32> to vector<8x1xf32>
    %164 = arith.negf %163 : vector<8x1xf32>
    %165 = math.exp %164 : vector<8x1xf32>
    %cst_89 = arith.constant 1.000000e+00 : f32
    %166 = vector.broadcast %cst_89 : f32 to vector<8x1xf32>
    %167 = arith.addf %166, %165 : vector<8x1xf32>
    %168 = arith.divf %166, %167 : vector<8x1xf32>
    %169 = arith.subf %127, %160 : vector<8x32xf32>
    %170 = arith.mulf %169, %169 : vector<8x32xf32>
    %cst_90 = arith.constant dense<0.000000e+00> : vector<8xf32>
    %171 = vector.multi_reduction <add>, %170, %cst_90 [1] : vector<8x32xf32> to vector<8xf32>
    %172 = vector.shape_cast %171 : vector<8xf32> to vector<8x1xf32>
    %cst_91 = arith.constant 3.200000e+01 : f32
    %173 = vector.broadcast %cst_91 : f32 to vector<8x1xf32>
    %174 = arith.divf %172, %173 : vector<8x1xf32>
    %175 = math.sqrt %174 : vector<8x1xf32>
    %176 = tpu.concatenate %118, %99, %109, %127 in 1 : vector<8x32xf32>, vector<8x32xf32>, vector<8x32xf32>, vector<8x32xf32> -> vector<8x128xf32>
    %c0_92 = arith.constant 0 : index
    %c0_93 = arith.constant 0 : index
    %177 = vector.load %arg20[%c0_92, %c0_93] : memref<8x128xf32, #tpu.memory_space<vmem>>, vector<8x128xf32>
    tpu.vector_store %arg20[%c0_92, %c0_93], %176 {strides = array<i32>} : memref<8x128xf32, #tpu.memory_space<vmem>>, vector<8x128xf32>,
    %178 = tpu.iota {dimensions = array<i32: 1>} : vector<8x8xi32>
    %c0_i32 = arith.constant 0 : i32
    %179 = vector.broadcast %c0_i32 : i32 to vector<8x8xi32>
    %180 = arith.cmpi eq, %178, %179 : vector<8x8xi32>
    %cst_94 = arith.constant 0.000000e+00 : f32
    %181 = vector.shape_cast %130 : vector<8x1xf32> to vector<8x1xf32>
    %182 = vector.broadcast %181 : vector<8x1xf32> to vector<8x8xf32>
    %183 = vector.broadcast %cst_94 : f32 to vector<8x8xf32>
    %184 = arith.select %180, %182, %183 : vector<8x8xi1>, vector<8x8xf32>
    %c1_i32 = arith.constant 1 : i32
    %185 = vector.broadcast %c1_i32 : i32 to vector<8x8xi32>
    %186 = arith.cmpi eq, %178, %185 : vector<8x8xi32>
    %cst_95 = arith.constant 0.000000e+00 : f32
    %187 = vector.shape_cast %135 : vector<8x1xf32> to vector<8x1xf32>
    %188 = vector.broadcast %187 : vector<8x1xf32> to vector<8x8xf32>
    %189 = vector.broadcast %cst_95 : f32 to vector<8x8xf32>
    %190 = arith.select %186, %188, %189 : vector<8x8xi1>, vector<8x8xf32>
    %191 = arith.addf %184, %190 : vector<8x8xf32>
    %c2_i32 = arith.constant 2 : i32
    %192 = vector.broadcast %c2_i32 : i32 to vector<8x8xi32>
    %193 = arith.cmpi eq, %178, %192 : vector<8x8xi32>
    %cst_96 = arith.constant 0.000000e+00 : f32
    %194 = vector.shape_cast %168 : vector<8x1xf32> to vector<8x1xf32>
    %195 = vector.broadcast %194 : vector<8x1xf32> to vector<8x8xf32>
    %196 = vector.broadcast %cst_96 : f32 to vector<8x8xf32>
    %197 = arith.select %193, %195, %196 : vector<8x8xi1>, vector<8x8xf32>
    %198 = arith.addf %191, %197 : vector<8x8xf32>
    %c3_i32 = arith.constant 3 : i32
    %199 = vector.broadcast %c3_i32 : i32 to vector<8x8xi32>
    %200 = arith.cmpi eq, %178, %199 : vector<8x8xi32>
    %cst_97 = arith.constant 0.000000e+00 : f32
    %201 = vector.shape_cast %175 : vector<8x1xf32> to vector<8x1xf32>
    %202 = vector.broadcast %201 : vector<8x1xf32> to vector<8x8xf32>
    %203 = vector.broadcast %cst_97 : f32 to vector<8x8xf32>
    %204 = arith.select %200, %202, %203 : vector<8x8xi1>, vector<8x8xf32>
    %205 = arith.addf %198, %204 : vector<8x8xf32>
    %c0_98 = arith.constant 0 : index
    %c0_99 = arith.constant 0 : index
    %206 = vector.load %arg21[%c0_98, %c0_99] : memref<8x8xf32, #tpu.memory_space<vmem>>, vector<8x8xf32>
    tpu.vector_store %arg21[%c0_98, %c0_99], %205 {strides = array<i32>} : memref<8x8xf32, #tpu.memory_space<vmem>>, vector<8x8xf32>,
    return
  }
  func.func @transform_0(%arg0: i32) -> (i32, i32) {
    %c0_i32 = arith.constant 0 : i32
    %c0_i32_0 = arith.constant 0 : i32
    return %arg0, %c0_i32 : i32, i32
  }
  func.func @transform_1(%arg0: i32) -> (i32, i32) {
    %c0_i32 = arith.constant 0 : i32
    %c0_i32_0 = arith.constant 0 : i32
    return %arg0, %c0_i32 : i32, i32
  }
  func.func @transform_2(%arg0: i32) -> (i32, i32) {
    %c0_i32 = arith.constant 0 : i32
    %c0_i32_0 = arith.constant 0 : i32
    return %arg0, %c0_i32 : i32, i32
  }
  func.func @transform_3(%arg0: i32) -> (i32, i32) {
    %c0_i32 = arith.constant 0 : i32
    %c0_i32_0 = arith.constant 0 : i32
    return %arg0, %c0_i32 : i32, i32
  }
  func.func @transform_4(%arg0: i32) -> (i32, i32) {
    %c0_i32 = arith.constant 0 : i32
    %c0_i32_0 = arith.constant 0 : i32
    return %arg0, %c0_i32 : i32, i32
  }
  func.func @transform_5(%arg0: i32) -> (i32, i32) {
    %c0_i32 = arith.constant 0 : i32
    %c0_i32_0 = arith.constant 0 : i32
    %c0_i32_1 = arith.constant 0 : i32
    return %c0_i32, %c0_i32_0 : i32, i32
  }
  func.func @transform_6(%arg0: i32) -> (i32, i32) {
    %c0_i32 = arith.constant 0 : i32
    %c0_i32_0 = arith.constant 0 : i32
    %c0_i32_1 = arith.constant 0 : i32
    return %c0_i32, %c0_i32_0 : i32, i32
  }
  func.func @transform_7(%arg0: i32) -> (i32, i32) {
    %c0_i32 = arith.constant 0 : i32
    %c0_i32_0 = arith.constant 0 : i32
    %c0_i32_1 = arith.constant 0 : i32
    return %c0_i32, %c0_i32_0 : i32, i32
  }
  func.func @transform_8(%arg0: i32) -> (i32, i32) {
    %c0_i32 = arith.constant 0 : i32
    %c0_i32_0 = arith.constant 0 : i32
    %c0_i32_1 = arith.constant 0 : i32
    return %c0_i32, %c0_i32_0 : i32, i32
  }
  func.func @transform_9(%arg0: i32) -> (i32, i32, i32) {
    %c0_i32 = arith.constant 0 : i32
    %c0_i32_0 = arith.constant 0 : i32
    %c0_i32_1 = arith.constant 0 : i32
    %c0_i32_2 = arith.constant 0 : i32
    return %c0_i32, %c0_i32_0, %c0_i32_1 : i32, i32, i32
  }
  func.func @transform_10(%arg0: i32) -> (i32, i32, i32) {
    %c0_i32 = arith.constant 0 : i32
    %c0_i32_0 = arith.constant 0 : i32
    %c0_i32_1 = arith.constant 0 : i32
    %c0_i32_2 = arith.constant 0 : i32
    return %c0_i32, %c0_i32_0, %c0_i32_1 : i32, i32, i32
  }
  func.func @transform_11(%arg0: i32) -> (i32, i32, i32) {
    %c0_i32 = arith.constant 0 : i32
    %c0_i32_0 = arith.constant 0 : i32
    %c0_i32_1 = arith.constant 0 : i32
    %c0_i32_2 = arith.constant 0 : i32
    return %c0_i32, %c0_i32_0, %c0_i32_1 : i32, i32, i32
  }
  func.func @transform_12(%arg0: i32) -> (i32, i32, i32) {
    %c0_i32 = arith.constant 0 : i32
    %c0_i32_0 = arith.constant 0 : i32
    %c0_i32_1 = arith.constant 0 : i32
    %c0_i32_2 = arith.constant 0 : i32
    return %c0_i32, %c0_i32_0, %c0_i32_1 : i32, i32, i32
  }
  func.func @transform_13(%arg0: i32) -> (i32, i32, i32) {
    %c0_i32 = arith.constant 0 : i32
    %c0_i32_0 = arith.constant 0 : i32
    %c0_i32_1 = arith.constant 0 : i32
    %c0_i32_2 = arith.constant 0 : i32
    return %c0_i32, %c0_i32_0, %c0_i32_1 : i32, i32, i32
  }
  func.func @transform_14(%arg0: i32) -> (i32, i32, i32) {
    %c0_i32 = arith.constant 0 : i32
    %c0_i32_0 = arith.constant 0 : i32
    %c0_i32_1 = arith.constant 0 : i32
    %c0_i32_2 = arith.constant 0 : i32
    return %c0_i32, %c0_i32_0, %c0_i32_1 : i32, i32, i32
  }
  func.func @transform_15(%arg0: i32) -> (i32, i32, i32) {
    %c0_i32 = arith.constant 0 : i32
    %c0_i32_0 = arith.constant 0 : i32
    %c0_i32_1 = arith.constant 0 : i32
    %c0_i32_2 = arith.constant 0 : i32
    return %c0_i32, %c0_i32_0, %c0_i32_1 : i32, i32, i32
  }
  func.func @transform_16(%arg0: i32) -> (i32, i32, i32) {
    %c0_i32 = arith.constant 0 : i32
    %c0_i32_0 = arith.constant 0 : i32
    %c0_i32_1 = arith.constant 0 : i32
    %c0_i32_2 = arith.constant 0 : i32
    return %c0_i32, %c0_i32_0, %c0_i32_1 : i32, i32, i32
  }
  func.func @transform_17(%arg0: i32) -> (i32, i32) {
    %c0_i32 = arith.constant 0 : i32
    %c0_i32_0 = arith.constant 0 : i32
    %c0_i32_1 = arith.constant 0 : i32
    return %c0_i32, %c0_i32_0 : i32, i32
  }
  func.func @transform_18(%arg0: i32) -> (i32, i32) {
    %c0_i32 = arith.constant 0 : i32
    %c0_i32_0 = arith.constant 0 : i32
    %c0_i32_1 = arith.constant 0 : i32
    return %c0_i32, %c0_i32_0 : i32, i32
  }
  func.func @transform_19(%arg0: i32) -> (i32, i32) {
    %c0_i32 = arith.constant 0 : i32
    %c0_i32_0 = arith.constant 0 : i32
    return %arg0, %c0_i32 : i32, i32
  }
  func.func @transform_20(%arg0: i32) -> (i32, i32) {
    %c0_i32 = arith.constant 0 : i32
    %c0_i32_0 = arith.constant 0 : i32
    return %arg0, %c0_i32 : i32, i32
  }
}

</mosaic_0001>

<llo_original>
// kernel: tpu_custom_call.1
$region0: #{tpu_custom_call.1}
  #allocation0 [shape = 'u32[]', space=smem, size = 0x4, offset = 0x4, fixed_abs, tag = 'smem constant byte address 0x4 - core index']
  #allocation1 [shape = 'u32[144,128]{1,0:T(1,128)}', space=vmem, size = 0x12000, scoped, tag = 'internal scratch']
  %s0 = inlined_call_operand.vmem [shape: s32[16,1], index: 0, kind: input, shape index: {}]
  %s1 = inlined_call_operand.vmem [shape: s32[16,1], index: 1, kind: input, shape index: {}]
  %s2 = inlined_call_operand.vmem [shape: s32[16,1], index: 2, kind: input, shape index: {}]
  %s3 = inlined_call_operand.vmem [shape: s32[16,1], index: 3, kind: input, shape index: {}]
  %s4 = inlined_call_operand.vmem [shape: s32[16,1], index: 4, kind: input, shape index: {}]
  %s5 = inlined_call_operand.hbm [shape: f32[16,32], index: 5, kind: input, shape index: {}]
  %s6 = inlined_call_operand.hbm [shape: f32[16,32], index: 6, kind: input, shape index: {}]
  %s7 = inlined_call_operand.vmem [shape: f32[24,32], index: 7, kind: input, shape index: {}]
  %s8 = inlined_call_operand.vmem [shape: f32[8,32], index: 8, kind: input, shape index: {}]
  %s9 = inlined_call_operand.vmem [shape: f32[2,32,4], index: 9, kind: input, shape index: {}]
  %s10 = inlined_call_operand.vmem [shape: f32[2,2,32], index: 10, kind: input, shape index: {}]
  %s11 = inlined_call_operand.vmem [shape: f32[2,32,32], index: 11, kind: input, shape index: {}]
  %s12 = inlined_call_operand.vmem [shape: f32[2,1,32], index: 12, kind: input, shape index: {}]
  %s13 = inlined_call_operand.vmem [shape: f32[2,32,32], index: 13, kind: input, shape index: {}]
  %s14 = inlined_call_operand.vmem [shape: f32[2,1,32], index: 14, kind: input, shape index: {}]
  %s15 = inlined_call_operand.vmem [shape: f32[1,64,64], index: 15, kind: input, shape index: {}]
  %s16 = inlined_call_operand.vmem [shape: f32[1,1,64], index: 16, kind: input, shape index: {}]
  %s17 = inlined_call_operand.vmem [shape: f32[64,32], index: 17, kind: input, shape index: {}]
  %s18 = inlined_call_operand.vmem [shape: f32[1,32], index: 18, kind: input, shape index: {}]
  %s19 = inlined_call_operand.hbm [shape: f32[16,128], index: 19, kind: output, shape index: {0}]
  %s20 = inlined_call_operand.vmem [shape: f32[16,8], index: 20, kind: output, shape index: {1}]
  %21 = xla_tuple %s19, %s20
  %s22 = sld [smem:[#allocation0]]
  $region125: #{tpu_custom_call.1} parent=0
    _
  %s24 = ssub.s32 1, %s22
  %s25 = scalar_select 0, %s24, %s22
  $region1: #{tpu_custom_call.1} parent=0
    #allocation2 [shape = 'u8[8192]{0}', space=vmem, size = 0x2000, scoped, tag = 'input window, operand 5, single buffered']
    #allocation3 [shape = 's32[2]{0}', space=sflag, size = 0x8, scoped, tag = 'scoped memory for tpu_custom_call.1']
    #allocation4 [shape = 's32[2]{0}', space=sflag, size = 0x8, scoped, tag = 'scoped memory for tpu_custom_call.1']
    #allocation5 [shape = 'u8[8192]{0}', space=vmem, size = 0x2000, scoped, tag = 'input window, operand 6, single buffered']
    #allocation6 [shape = 's32[1]{0}', space=sflag, size = 0x4, scoped, tag = 'scoped memory for tpu_custom_call.1']
    #allocation7 [shape = 'u8[8192]{0}', space=vmem, size = 0x2000, scoped, tag = 'output window, operand 0']
    %26 = vsyncpa [#allocation3], 0
    %27 = vsyncpa [#allocation6], 0
    %28 = vsyncpa [#allocation4], 0
    %s29 = scalar_lea.sflag [#allocation4], 1
    %30 = vsyncpa %s29, 0
    loop: start=0, step=1, limit=4
    $region2: #{tpu_custom_call.1} parent=1 // loop_pre_header
      _
    $region3: #{tpu_custom_call.1} parent=1 // loop_header
      %s32 = sphi 0, %s36
      %p33 = scmp.ge.s32.totalorder %s32, 4
      %s42 = sphi 0, %s44
      %s45 = sphi 0, %s42
      %s46 = sphi 0, %s45
      %s62 = sphi 0, %s46
      %s68 = sphi 0, %s70
      %s71 = sphi 0, %s68
      %s72 = sphi 0, %s71
      %s88 = sphi 0, %s72
      %s94 = sphi 0, %s96
      %s97 = sphi 0, %s94
      %s98 = sphi 0, %s97
      %s114 = sphi 0, %s98
      %s120 = sphi 0, %s122
      %s123 = sphi 0, %s120
      %s124 = sphi 0, %s123
      %s140 = sphi 0, %s124
      %s146 = sphi 0, %s148
      %s149 = sphi 0, %s146
      %s150 = sphi 0, %s149
      %s166 = sphi 0, %s150
      %s170 = sphi 0, %s170
      %s172 = sphi 0, %s170
      %s173 = sphi 0, %s172
      %s187 = sphi 0, %s173
      %s191 = sphi 0, %s191
      %s193 = sphi 0, %s191
      %s194 = sphi 0, %s193
      %s208 = sphi 0, %s194
      %s212 = sphi 0, %s212
      %s214 = sphi 0, %s212
      %s215 = sphi 0, %s214
      %s229 = sphi 0, %s215
      %s233 = sphi 0, %s233
      %s235 = sphi 0, %s233
      %s236 = sphi 0, %s235
      %s250 = sphi 0, %s236
      %s254 = sphi 0, %s254
      %s256 = sphi 0, %s254
      %s257 = sphi 0, %s256
      %s271 = sphi 0, %s257
      %s275 = sphi 0, %s275
      %s277 = sphi 0, %s275
      %s278 = sphi 0, %s277
      %s292 = sphi 0, %s278
      %s296 = sphi 0, %s296
      %s298 = sphi 0, %s296
      %s299 = sphi 0, %s298
      %s313 = sphi 0, %s299
      %s317 = sphi 0, %s317
      %s319 = sphi 0, %s317
      %s320 = sphi 0, %s319
      %s334 = sphi 0, %s320
      %s338 = sphi 0, %s338
      %s340 = sphi 0, %s338
      %s341 = sphi 0, %s340
      %s355 = sphi 0, %s341
      %s359 = sphi 0, %s359
      %s361 = sphi 0, %s359
      %s362 = sphi 0, %s361
      %s376 = sphi 0, %s362
      %s380 = sphi 0, %s380
      %s382 = sphi 0, %s380
      %s383 = sphi 0, %s382
      %s397 = sphi 0, %s383
      %s401 = sphi 0, %s401
      %s403 = sphi 0, %s401
      %s404 = sphi 0, %s403
      %s418 = sphi 0, %s404
      %s422 = sphi 0, %s422
      %s424 = sphi 0, %s422
      %s425 = sphi 0, %s424
      %s439 = sphi 0, %s425
      %s443 = sphi 0, %s443
      %s445 = sphi 0, %s443
      %s446 = sphi 0, %s445
      %s460 = sphi 0, %s446
      %s466 = sphi 0, %s468
      %s469 = sphi 0, %s466
      %s470 = sphi 0, %s469
      %s486 = sphi 0, %s470
      %s492 = sphi 0, %s494
      %s495 = sphi 0, %s492
      %s496 = sphi 0, %s495
      %s512 = sphi 0, %s496
    $region4: #{tpu_custom_call.1} parent=1 // loop_header_branch
      %35 = sbr.rel (%p33) target = $region8
    $region5: #{tpu_custom_call.1} parent=1 // loop_body
      %s37 = ssub.s32 %s32, 1
      %s38 = ssub.s32 %s32, 2
      %s39 = sadd.s32 %s32, 1
      %s40 = ssub.s32 %s32, %s39
      %p41 = scmp.eq.s32.totalorder %s40, 0
      %s43 = sadd.s32 %s42, 1
      %s44 = scalar_select %p41, %s42, %s43
      %p47 = pneg %p41
      %p48 = scmp.eq.s32.totalorder %s32, 1
      %p49 = por %p47, %p48
      %p50 = scmp.ne.s32.totalorder %s42, %s45
      %p51 = scmp.eq.s32.totalorder %s32, 0
      %p52 = por %p50, %p51
      %p53 = scmp.ne.s32.totalorder %s42, %s45
      %p54 = scmp.eq.s32.totalorder %s37, 1
      %p55 = por %p53, %p54
      %p56 = scmp.ne.s32.totalorder %s45, %s46
      %p57 = scmp.eq.s32.totalorder %s37, 0
      %p58 = por %p56, %p57
      %p59 = scmp.ne.s32.totalorder %s45, %s46
      %p60 = scmp.eq.s32.totalorder %s38, 1
      %p61 = por %p59, %p60
      %p63 = scmp.ne.s32.totalorder %s46, %s62
      %p64 = scmp.eq.s32.totalorder %s38, 0
      %p65 = por %p63, %p64
      %s66 = ssub.s32 %s32, %s39
      %p67 = scmp.eq.s32.totalorder %s66, 0
      %s69 = sadd.s32 %s68, 1
      %s70 = scalar_select %p67, %s68, %s69
      %p73 = pneg %p67
      %p74 = scmp.eq.s32.totalorder %s32, 1
      %p75 = por %p73, %p74
      %p76 = scmp.ne.s32.totalorder %s68, %s71
      %p77 = scmp.eq.s32.totalorder %s32, 0
      %p78 = por %p76, %p77
      %p79 = scmp.ne.s32.totalorder %s68, %s71
      %p80 = scmp.eq.s32.totalorder %s37, 1
      %p81 = por %p79, %p80
      %p82 = scmp.ne.s32.totalorder %s71, %s72
      %p83 = scmp.eq.s32.totalorder %s37, 0
      %p84 = por %p82, %p83
      %p85 = scmp.ne.s32.totalorder %s71, %s72
      %p86 = scmp.eq.s32.totalorder %s38, 1
      %p87 = por %p85, %p86
      %p89 = scmp.ne.s32.totalorder %s72, %s88
      %p90 = scmp.eq.s32.totalorder %s38, 0
      %p91 = por %p89, %p90
      %s92 = ssub.s32 %s32, %s39
      %p93 = scmp.eq.s32.totalorder %s92, 0
      %s95 = sadd.s32 %s94, 1
      %s96 = scalar_select %p93, %s94, %s95
      %p99 = pneg %p93
      %p100 = scmp.eq.s32.totalorder %s32, 1
      %p101 = por %p99, %p100
      %p102 = scmp.ne.s32.totalorder %s94, %s97
      %p103 = scmp.eq.s32.totalorder %s32, 0
      %p104 = por %p102, %p103
      %p105 = scmp.ne.s32.totalorder %s94, %s97
      %p106 = scmp.eq.s32.totalorder %s37, 1
      %p107 = por %p105, %p106
      %p108 = scmp.ne.s32.totalorder %s97, %s98
      %p109 = scmp.eq.s32.totalorder %s37, 0
      %p110 = por %p108, %p109
      %p111 = scmp.ne.s32.totalorder %s97, %s98
      %p112 = scmp.eq.s32.totalorder %s38, 1
      %p113 = por %p111, %p112
      %p115 = scmp.ne.s32.totalorder %s98, %s114
      %p116 = scmp.eq.s32.totalorder %s38, 0
      %p117 = por %p115, %p116
      %s118 = ssub.s32 %s32, %s39
      %p119 = scmp.eq.s32.totalorder %s118, 0
      %s121 = sadd.s32 %s120, 1
      %s122 = scalar_select %p119, %s120, %s121
      %p125 = pneg %p119
      %p126 = scmp.eq.s32.totalorder %s32, 1
      %p127 = por %p125, %p126
      %p128 = scmp.ne.s32.totalorder %s120, %s123
      %p129 = scmp.eq.s32.totalorder %s32, 0
      %p130 = por %p128, %p129
      %p131 = scmp.ne.s32.totalorder %s120, %s123
      %p132 = scmp.eq.s32.totalorder %s37, 1
      %p133 = por %p131, %p132
      %p134 = scmp.ne.s32.totalorder %s123, %s124
      %p135 = scmp.eq.s32.totalorder %s37, 0
      %p136 = por %p134, %p135
      %p137 = scmp.ne.s32.totalorder %s123, %s124
      %p138 = scmp.eq.s32.totalorder %s38, 1
      %p139 = por %p137, %p138
      %p141 = scmp.ne.s32.totalorder %s124, %s140
      %p142 = scmp.eq.s32.totalorder %s38, 0
      %p143 = por %p141, %p142
      %s144 = ssub.s32 %s32, %s39
      %p145 = scmp.eq.s32.totalorder %s144, 0
      %s147 = sadd.s32 %s146, 1
      %s148 = scalar_select %p145, %s146, %s147
      %p151 = pneg %p145
      %p152 = scmp.eq.s32.totalorder %s32, 1
      %p153 = por %p151, %p152
      %p154 = scmp.ne.s32.totalorder %s146, %s149
      %p155 = scmp.eq.s32.totalorder %s32, 0
      %p156 = por %p154, %p155
      %p157 = scmp.ne.s32.totalorder %s146, %s149
      %p158 = scmp.eq.s32.totalorder %s37, 1
      %p159 = por %p157, %p158
      %p160 = scmp.ne.s32.totalorder %s149, %s150
      %p161 = scmp.eq.s32.totalorder %s37, 0
      %p162 = por %p160, %p161
      %p163 = scmp.ne.s32.totalorder %s149, %s150
      %p164 = scmp.eq.s32.totalorder %s38, 1
      %p165 = por %p163, %p164
      %p167 = scmp.ne.s32.totalorder %s150, %s166
      %p168 = scmp.eq.s32.totalorder %s38, 0
      %p169 = por %p167, %p168
      %s171 = sadd.s32 %s170, 1
      %p174 = scmp.eq.s32.totalorder %s32, 1
      %p175 = scmp.ne.s32.totalorder %s170, %s172
      %p176 = scmp.eq.s32.totalorder %s32, 0
      %p177 = por %p175, %p176
      %p178 = scmp.ne.s32.totalorder %s170, %s172
      %p179 = scmp.eq.s32.totalorder %s37, 1
      %p180 = por %p178, %p179
      %p181 = scmp.ne.s32.totalorder %s172, %s173
      %p182 = scmp.eq.s32.totalorder %s37, 0
      %p183 = por %p181, %p182
      %p184 = scmp.ne.s32.totalorder %s172, %s173
      %p185 = scmp.eq.s32.totalorder %s38, 1
      %p186 = por %p184, %p185
      %p188 = scmp.ne.s32.totalorder %s173, %s187
      %p189 = scmp.eq.s32.totalorder %s38, 0
      %p190 = por %p188, %p189
      %s192 = sadd.s32 %s191, 1
      %p195 = scmp.eq.s32.totalorder %s32, 1
      %p196 = scmp.ne.s32.totalorder %s191, %s193
      %p197 = scmp.eq.s32.totalorder %s32, 0
      %p198 = por %p196, %p197
      %p199 = scmp.ne.s32.totalorder %s191, %s193
      %p200 = scmp.eq.s32.totalorder %s37, 1
      %p201 = por %p199, %p200
      %p202 = scmp.ne.s32.totalorder %s193, %s194
      %p203 = scmp.eq.s32.totalorder %s37, 0
      %p204 = por %p202, %p203
      %p205 = scmp.ne.s32.totalorder %s193, %s194
      %p206 = scmp.eq.s32.totalorder %s38, 1
      %p207 = por %p205, %p206
      %p209 = scmp.ne.s32.totalorder %s194, %s208
      %p210 = scmp.eq.s32.totalorder %s38, 0
      %p211 = por %p209, %p210
      %s213 = sadd.s32 %s212, 1
      %p216 = scmp.eq.s32.totalorder %s32, 1
      %p217 = scmp.ne.s32.totalorder %s212, %s214
      %p218 = scmp.eq.s32.totalorder %s32, 0
      %p219 = por %p217, %p218
      %p220 = scmp.ne.s32.totalorder %s212, %s214
      %p221 = scmp.eq.s32.totalorder %s37, 1
      %p222 = por %p220, %p221
      %p223 = scmp.ne.s32.totalorder %s214, %s215
      %p224 = scmp.eq.s32.totalorder %s37, 0
      %p225 = por %p223, %p224
      %p226 = scmp.ne.s32.totalorder %s214, %s215
      %p227 = scmp.eq.s32.totalorder %s38, 1
      %p228 = por %p226, %p227
      %p230 = scmp.ne.s32.totalorder %s215, %s229
      %p231 = scmp.eq.s32.totalorder %s38, 0
      %p232 = por %p230, %p231
      %s234 = sadd.s32 %s233, 1
      %p237 = scmp.eq.s32.totalorder %s32, 1
      %p238 = scmp.ne.s32.totalorder %s233, %s235
      %p239 = scmp.eq.s32.totalorder %s32, 0
      %p240 = por %p238, %p239
      %p241 = scmp.ne.s32.totalorder %s233, %s235
      %p242 = scmp.eq.s32.totalorder %s37, 1
      %p243 = por %p241, %p242
      %p244 = scmp.ne.s32.totalorder %s235, %s236
      %p245 = scmp.eq.s32.totalorder %s37, 0
      %p246 = por %p244, %p245
      %p247 = scmp.ne.s32.totalorder %s235, %s236
      %p248 = scmp.eq.s32.totalorder %s38, 1
      %p249 = por %p247, %p248
      %p251 = scmp.ne.s32.totalorder %s236, %s250
      %p252 = scmp.eq.s32.totalorder %s38, 0
      %p253 = por %p251, %p252
      %s255 = sadd.s32 %s254, 1
      %p258 = scmp.eq.s32.totalorder %s32, 1
      %p259 = scmp.ne.s32.totalorder %s254, %s256
      %p260 = scmp.eq.s32.totalorder %s32, 0
      %p261 = por %p259, %p260
      %p262 = scmp.ne.s32.totalorder %s254, %s256
      %p263 = scmp.eq.s32.totalorder %s37, 1
      %p264 = por %p262, %p263
      %p265 = scmp.ne.s32.totalorder %s256, %s257
      %p266 = scmp.eq.s32.totalorder %s37, 0
      %p267 = por %p265, %p266
      %p268 = scmp.ne.s32.totalorder %s256, %s257
      %p269 = scmp.eq.s32.totalorder %s38, 1
      %p270 = por %p268, %p269
      %p272 = scmp.ne.s32.totalorder %s257, %s271
      %p273 = scmp.eq.s32.totalorder %s38, 0
      %p274 = por %p272, %p273
      %s276 = sadd.s32 %s275, 1
      %p279 = scmp.eq.s32.totalorder %s32, 1
      %p280 = scmp.ne.s32.totalorder %s275, %s277
      %p281 = scmp.eq.s32.totalorder %s32, 0
      %p282 = por %p280, %p281
      %p283 = scmp.ne.s32.totalorder %s275, %s277
      %p284 = scmp.eq.s32.totalorder %s37, 1
      %p285 = por %p283, %p284
      %p286 = scmp.ne.s32.totalorder %s277, %s278
      %p287 = scmp.eq.s32.totalorder %s37, 0
      %p288 = por %p286, %p287
      %p289 = scmp.ne.s32.totalorder %s277, %s278
      %p290 = scmp.eq.s32.totalorder %s38, 1
      %p291 = por %p289, %p290
      %p293 = scmp.ne.s32.totalorder %s278, %s292
      %p294 = scmp.eq.s32.totalorder %s38, 0
      %p295 = por %p293, %p294
      %s297 = sadd.s32 %s296, 1
      %p300 = scmp.eq.s32.totalorder %s32, 1
      %p301 = scmp.ne.s32.totalorder %s296, %s298
      %p302 = scmp.eq.s32.totalorder %s32, 0
      %p303 = por %p301, %p302
      %p304 = scmp.ne.s32.totalorder %s296, %s298
      %p305 = scmp.eq.s32.totalorder %s37, 1
      %p306 = por %p304, %p305
      %p307 = scmp.ne.s32.totalorder %s298, %s299
      %p308 = scmp.eq.s32.totalorder %s37, 0
      %p309 = por %p307, %p308
      %p310 = scmp.ne.s32.totalorder %s298, %s299
      %p311 = scmp.eq.s32.totalorder %s38, 1
      %p312 = por %p310, %p311
      %p314 = scmp.ne.s32.totalorder %s299, %s313
      %p315 = scmp.eq.s32.totalorder %s38, 0
      %p316 = por %p314, %p315
      %s318 = sadd.s32 %s317, 1
      %p321 = scmp.eq.s32.totalorder %s32, 1
      %p322 = scmp.ne.s32.totalorder %s317, %s319
      %p323 = scmp.eq.s32.totalorder %s32, 0
      %p324 = por %p322, %p323
      %p325 = scmp.ne.s32.totalorder %s317, %s319
      %p326 = scmp.eq.s32.totalorder %s37, 1
      %p327 = por %p325, %p326
      %p328 = scmp.ne.s32.totalorder %s319, %s320
      %p329 = scmp.eq.s32.totalorder %s37, 0
      %p330 = por %p328, %p329
      %p331 = scmp.ne.s32.totalorder %s319, %s320
      %p332 = scmp.eq.s32.totalorder %s38, 1
      %p333 = por %p331, %p332
      %p335 = scmp.ne.s32.totalorder %s320, %s334
      %p336 = scmp.eq.s32.totalorder %s38, 0
      %p337 = por %p335, %p336
      %s339 = sadd.s32 %s338, 1
      %p342 = scmp.eq.s32.totalorder %s32, 1
      %p343 = scmp.ne.s32.totalorder %s338, %s340
      %p344 = scmp.eq.s32.totalorder %s32, 0
      %p345 = por %p343, %p344
      %p346 = scmp.ne.s32.totalorder %s338, %s340
      %p347 = scmp.eq.s32.totalorder %s37, 1
      %p348 = por %p346, %p347
      %p349 = scmp.ne.s32.totalorder %s340, %s341
      %p350 = scmp.eq.s32.totalorder %s37, 0
      %p351 = por %p349, %p350
      %p352 = scmp.ne.s32.totalorder %s340, %s341
      %p353 = scmp.eq.s32.totalorder %s38, 1
      %p354 = por %p352, %p353
      %p356 = scmp.ne.s32.totalorder %s341, %s355
      %p357 = scmp.eq.s32.totalorder %s38, 0
      %p358 = por %p356, %p357
      %s360 = sadd.s32 %s359, 1
      %p363 = scmp.eq.s32.totalorder %s32, 1
      %p364 = scmp.ne.s32.totalorder %s359, %s361
      %p365 = scmp.eq.s32.totalorder %s32, 0
      %p366 = por %p364, %p365
      %p367 = scmp.ne.s32.totalorder %s359, %s361
      %p368 = scmp.eq.s32.totalorder %s37, 1
      %p369 = por %p367, %p368
      %p370 = scmp.ne.s32.totalorder %s361, %s362
      %p371 = scmp.eq.s32.totalorder %s37, 0
      %p372 = por %p370, %p371
      %p373 = scmp.ne.s32.totalorder %s361, %s362
      %p374 = scmp.eq.s32.totalorder %s38, 1
      %p375 = por %p373, %p374
      %p377 = scmp.ne.s32.totalorder %s362, %s376
      %p378 = scmp.eq.s32.totalorder %s38, 0
      %p379 = por %p377, %p378
      %s381 = sadd.s32 %s380, 1
      %p384 = scmp.eq.s32.totalorder %s32, 1
      %p385 = scmp.ne.s32.totalorder %s380, %s382
      %p386 = scmp.eq.s32.totalorder %s32, 0
      %p387 = por %p385, %p386
      %p388 = scmp.ne.s32.totalorder %s380, %s382
      %p389 = scmp.eq.s32.totalorder %s37, 1
      %p390 = por %p388, %p389
      %p391 = scmp.ne.s32.totalorder %s382, %s383
      %p392 = scmp.eq.s32.totalorder %s37, 0
      %p393 = por %p391, %p392
      %p394 = scmp.ne.s32.totalorder %s382, %s383
      %p395 = scmp.eq.s32.totalorder %s38, 1
      %p396 = por %p394, %p395
      %p398 = scmp.ne.s32.totalorder %s383, %s397
      %p399 = scmp.eq.s32.totalorder %s38, 0
      %p400 = por %p398, %p399
      %s402 = sadd.s32 %s401, 1
      %p405 = scmp.eq.s32.totalorder %s32, 1
      %p406 = scmp.ne.s32.totalorder %s401, %s403
      %p407 = scmp.eq.s32.totalorder %s32, 0
      %p408 = por %p406, %p407
      %p409 = scmp.ne.s32.totalorder %s401, %s403
      %p410 = scmp.eq.s32.totalorder %s37, 1
      %p411 = por %p409, %p410
      %p412 = scmp.ne.s32.totalorder %s403, %s404
      %p413 = scmp.eq.s32.totalorder %s37, 0
      %p414 = por %p412, %p413
      %p415 = scmp.ne.s32.totalorder %s403, %s404
      %p416 = scmp.eq.s32.totalorder %s38, 1
      %p417 = por %p415, %p416
      %p419 = scmp.ne.s32.totalorder %s404, %s418
      %p420 = scmp.eq.s32.totalorder %s38, 0
      %p421 = por %p419, %p420
      %s423 = sadd.s32 %s422, 1
      %p426 = scmp.eq.s32.totalorder %s32, 1
      %p427 = scmp.ne.s32.totalorder %s422, %s424
      %p428 = scmp.eq.s32.totalorder %s32, 0
      %p429 = por %p427, %p428
      %p430 = scmp.ne.s32.totalorder %s422, %s424
      %p431 = scmp.eq.s32.totalorder %s37, 1
      %p432 = por %p430, %p431
      %p433 = scmp.ne.s32.totalorder %s424, %s425
      %p434 = scmp.eq.s32.totalorder %s37, 0
      %p435 = por %p433, %p434
      %p436 = scmp.ne.s32.totalorder %s424, %s425
      %p437 = scmp.eq.s32.totalorder %s38, 1
      %p438 = por %p436, %p437
      %p440 = scmp.ne.s32.totalorder %s425, %s439
      %p441 = scmp.eq.s32.totalorder %s38, 0
      %p442 = por %p440, %p441
      %s444 = sadd.s32 %s443, 1
      %p447 = scmp.eq.s32.totalorder %s32, 1
      %p448 = scmp.ne.s32.totalorder %s443, %s445
      %p449 = scmp.eq.s32.totalorder %s32, 0
      %p450 = por %p448, %p449
      %p451 = scmp.ne.s32.totalorder %s443, %s445
      %p452 = scmp.eq.s32.totalorder %s37, 1
      %p453 = por %p451, %p452
      %p454 = scmp.ne.s32.totalorder %s445, %s446
      %p455 = scmp.eq.s32.totalorder %s37, 0
      %p456 = por %p454, %p455
      %p457 = scmp.ne.s32.totalorder %s445, %s446
      %p458 = scmp.eq.s32.totalorder %s38, 1
      %p459 = por %p457, %p458
      %p461 = scmp.ne.s32.totalorder %s446, %s460
      %p462 = scmp.eq.s32.totalorder %s38, 0
      %p463 = por %p461, %p462
      %s464 = ssub.s32 %s32, %s39
      %p465 = scmp.eq.s32.totalorder %s464, 0
      %s467 = sadd.s32 %s466, 1
      %s468 = scalar_select %p465, %s466, %s467
      %p471 = pneg %p465
      %p472 = scmp.eq.s32.totalorder %s32, 1
      %p473 = por %p471, %p472
      %p474 = scmp.ne.s32.totalorder %s466, %s469
      %p475 = scmp.eq.s32.totalorder %s32, 0
      %p476 = por %p474, %p475
      %p477 = scmp.ne.s32.totalorder %s466, %s469
      %p478 = scmp.eq.s32.totalorder %s37, 1
      %p479 = por %p477, %p478
      %p480 = scmp.ne.s32.totalorder %s469, %s470
      %p481 = scmp.eq.s32.totalorder %s37, 0
      %p482 = por %p480, %p481
      %p483 = scmp.ne.s32.totalorder %s469, %s470
      %p484 = scmp.eq.s32.totalorder %s38, 1
      %p485 = por %p483, %p484
      %p487 = scmp.ne.s32.totalorder %s470, %s486
      %p488 = scmp.eq.s32.totalorder %s38, 0
      %p489 = por %p487, %p488
      %s490 = ssub.s32 %s32, %s39
      %p491 = scmp.eq.s32.totalorder %s490, 0
      %s493 = sadd.s32 %s492, 1
      %s494 = scalar_select %p491, %s492, %s493
      %p497 = pneg %p491
      %p498 = scmp.eq.s32.totalorder %s32, 1
      %p499 = por %p497, %p498
      %p500 = scmp.ne.s32.totalorder %s492, %s495
      %p501 = scmp.eq.s32.totalorder %s32, 0
      %p502 = por %p500, %p501
      %p503 = scmp.ne.s32.totalorder %s492, %s495
      %p504 = scmp.eq.s32.totalorder %s37, 1
      %p505 = por %p503, %p504
      %p506 = scmp.ne.s32.totalorder %s495, %s496
      %p507 = scmp.eq.s32.totalorder %s37, 0
      %p508 = por %p506, %p507
      %p509 = scmp.ne.s32.totalorder %s495, %s496
      %p510 = scmp.eq.s32.totalorder %s38, 1
      %p511 = por %p509, %p510
      %p513 = scmp.ne.s32.totalorder %s496, %s512
      %p514 = scmp.eq.s32.totalorder %s38, 0
      %p515 = por %p513, %p514
      %p516 = scmp.le.s32.totalorder 1, %s32
      %p517 = scmp.lt.s32.totalorder %s32, 3
      %p518 = pnand %p516, %p517
      %p519 = pneg %p518
      // Predicated region
      $region9: #{tpu_custom_call.1} parent=5 // pred_check
        _
      $region10: #{tpu_custom_call.1} parent=5 // pred_check_branch
        %521 = sbr.rel (%p518) target = $region12
      $region11: #{tpu_custom_call.1} parent=5 // pred_region
        %s522 = ssub.s32 %s32, 1
        // Predicated region
        $region13: #{tpu_custom_call.1} parent=11 // pred_check
          %p523 = pneg %p183
        $region14: #{tpu_custom_call.1} parent=11 // pred_check_branch
          %525 = sbr.rel (%p523) target = $region16
        $region15: #{tpu_custom_call.1} parent=11 // pred_region
          %s527 = ssub.s32 256, 256
          %528 = vsyncadd [#allocation3], %s527
          %s529 = sshll.u32 [#allocation2], 4
          %s530 = int_to_ptr.vmem [resolvable:$true] %s529
          %535 = dma.hbm_to_vmem [thread:$0]  %s5, 256, %s530, [#allocation3], 128, 128, 8
        $region16: #{tpu_custom_call.1} parent=11 // pred_fallthru
          _
        // Predicated region
        $region17: #{tpu_custom_call.1} parent=11 // pred_check
          %p536 = pneg %p204
        $region18: #{tpu_custom_call.1} parent=11 // pred_check_branch
          %538 = sbr.rel (%p536) target = $region20
        $region19: #{tpu_custom_call.1} parent=11 // pred_region
          %s540 = ssub.s32 256, 256
          %541 = vsyncadd [#allocation6], %s540
          %s542 = sshll.u32 [#allocation5], 4
          %s543 = int_to_ptr.vmem [resolvable:$true] %s542
          %548 = dma.hbm_to_vmem [thread:$0]  %s6, 256, %s543, [#allocation6], 128, 128, 8
        $region20: #{tpu_custom_call.1} parent=11 // pred_fallthru
          _
        // Predicated region
        $region21: #{tpu_custom_call.1} parent=11 // pred_check
          %p549 = pneg %p225
        $region22: #{tpu_custom_call.1} parent=11 // pred_check_branch
          %551 = sbr.rel (%p549) target = $region24
        $region23: #{tpu_custom_call.1} parent=11 // pred_region
          _
        $region24: #{tpu_custom_call.1} parent=11 // pred_fallthru
          _
        // Predicated region
        $region25: #{tpu_custom_call.1} parent=11 // pred_check
          %p552 = pneg %p246
        $region26: #{tpu_custom_call.1} parent=11 // pred_check_branch
          %554 = sbr.rel (%p552) target = $region28
        $region27: #{tpu_custom_call.1} parent=11 // pred_region
          _
        $region28: #{tpu_custom_call.1} parent=11 // pred_fallthru
          _
        // Predicated region
        $region29: #{tpu_custom_call.1} parent=11 // pred_check
          %p555 = pneg %p267
        $region30: #{tpu_custom_call.1} parent=11 // pred_check_branch
          %557 = sbr.rel (%p555) target = $region32
        $region31: #{tpu_custom_call.1} parent=11 // pred_region
          _
        $region32: #{tpu_custom_call.1} parent=11 // pred_fallthru
          _
        // Predicated region
        $region33: #{tpu_custom_call.1} parent=11 // pred_check
          %p558 = pneg %p288
        $region34: #{tpu_custom_call.1} parent=11 // pred_check_branch
          %560 = sbr.rel (%p558) target = $region36
        $region35: #{tpu_custom_call.1} parent=11 // pred_region
          _
        $region36: #{tpu_custom_call.1} parent=11 // pred_fallthru
          _
        // Predicated region
        $region37: #{tpu_custom_call.1} parent=11 // pred_check
          %p561 = pneg %p309
        $region38: #{tpu_custom_call.1} parent=11 // pred_check_branch
          %563 = sbr.rel (%p561) target = $region40
        $region39: #{tpu_custom_call.1} parent=11 // pred_region
          _
        $region40: #{tpu_custom_call.1} parent=11 // pred_fallthru
          _
        // Predicated region
        $region41: #{tpu_custom_call.1} parent=11 // pred_check
          %p564 = pneg %p330
        $region42: #{tpu_custom_call.1} parent=11 // pred_check_branch
          %566 = sbr.rel (%p564) target = $region44
        $region43: #{tpu_custom_call.1} parent=11 // pred_region
          _
        $region44: #{tpu_custom_call.1} parent=11 // pred_fallthru
          _
        // Predicated region
        $region45: #{tpu_custom_call.1} parent=11 // pred_check
          %p567 = pneg %p351
        $region46: #{tpu_custom_call.1} parent=11 // pred_check_branch
          %569 = sbr.rel (%p567) target = $region48
        $region47: #{tpu_custom_call.1} parent=11 // pred_region
          _
        $region48: #{tpu_custom_call.1} parent=11 // pred_fallthru
          _
        // Predicated region
        $region49: #{tpu_custom_call.1} parent=11 // pred_check
          %p570 = pneg %p372
        $region50: #{tpu_custom_call.1} parent=11 // pred_check_branch
          %572 = sbr.rel (%p570) target = $region52
        $region51: #{tpu_custom_call.1} parent=11 // pred_region
          _
        $region52: #{tpu_custom_call.1} parent=11 // pred_fallthru
          _
        // Predicated region
        $region53: #{tpu_custom_call.1} parent=11 // pred_check
          %p573 = pneg %p393
        $region54: #{tpu_custom_call.1} parent=11 // pred_check_branch
          %575 = sbr.rel (%p573) target = $region56
        $region55: #{tpu_custom_call.1} parent=11 // pred_region
          _
        $region56: #{tpu_custom_call.1} parent=11 // pred_fallthru
          _
        // Predicated region
        $region57: #{tpu_custom_call.1} parent=11 // pred_check
          %p576 = pneg %p414
        $region58: #{tpu_custom_call.1} parent=11 // pred_check_branch
          %578 = sbr.rel (%p576) target = $region60
        $region59: #{tpu_custom_call.1} parent=11 // pred_region
          _
        $region60: #{tpu_custom_call.1} parent=11 // pred_fallthru
          _
        // Predicated region
        $region61: #{tpu_custom_call.1} parent=11 // pred_check
          %p579 = pneg %p435
        $region62: #{tpu_custom_call.1} parent=11 // pred_check_branch
          %581 = sbr.rel (%p579) target = $region64
        $region63: #{tpu_custom_call.1} parent=11 // pred_region
          _
        $region64: #{tpu_custom_call.1} parent=11 // pred_fallthru
          _
        // Predicated region
        $region65: #{tpu_custom_call.1} parent=11 // pred_check
          %p582 = pneg %p456
        $region66: #{tpu_custom_call.1} parent=11 // pred_check_branch
          %584 = sbr.rel (%p582) target = $region68
        $region67: #{tpu_custom_call.1} parent=11 // pred_region
          _
        $region68: #{tpu_custom_call.1} parent=11 // pred_fallthru
          _
      $region12: #{tpu_custom_call.1} parent=5 // pred_fallthru
        _
      %p585 = scmp.lt.s32.totalorder %s32, 2
      // Predicated region
      $region69: #{tpu_custom_call.1} parent=5 // pred_check
        %p586 = pneg %p585
      $region70: #{tpu_custom_call.1} parent=5 // pred_check_branch
        %588 = sbr.rel (%p586) target = $region72
      $region71: #{tpu_custom_call.1} parent=5 // pred_region
        // Predicated region
        $region73: #{tpu_custom_call.1} parent=71 // pred_check
          %p589 = pneg %p52
        $region74: #{tpu_custom_call.1} parent=71 // pred_check_branch
          %591 = sbr.rel (%p589) target = $region76
        $region75: #{tpu_custom_call.1} parent=71 // pred_region
          %p592 = scmp.lt.s32.totalorder %s32, 1
          %s593 = scalar_select %p592, %s32, 1
          %s594 = smul.addr %s593, 8
          %s595 = scalar_lea.vmem %s0, %s594
        $region76: #{tpu_custom_call.1} parent=71 // pred_fallthru
          _
        // Predicated region
        $region77: #{tpu_custom_call.1} parent=71 // pred_check
          %p596 = pneg %p78
        $region78: #{tpu_custom_call.1} parent=71 // pred_check_branch
          %598 = sbr.rel (%p596) target = $region80
        $region79: #{tpu_custom_call.1} parent=71 // pred_region
          %p599 = scmp.lt.s32.totalorder %s32, 1
          %s600 = scalar_select %p599, %s32, 1
          %s601 = smul.addr %s600, 8
          %s602 = scalar_lea.vmem %s1, %s601
        $region80: #{tpu_custom_call.1} parent=71 // pred_fallthru
          _
        // Predicated region
        $region81: #{tpu_custom_call.1} parent=71 // pred_check
          %p603 = pneg %p104
        $region82: #{tpu_custom_call.1} parent=71 // pred_check_branch
          %605 = sbr.rel (%p603) target = $region84
        $region83: #{tpu_custom_call.1} parent=71 // pred_region
          %p606 = scmp.lt.s32.totalorder %s32, 1
          %s607 = scalar_select %p606, %s32, 1
          %s608 = smul.addr %s607, 8
          %s609 = scalar_lea.vmem %s2, %s608
        $region84: #{tpu_custom_call.1} parent=71 // pred_fallthru
          _
        // Predicated region
        $region85: #{tpu_custom_call.1} parent=71 // pred_check
          %p610 = pneg %p130
        $region86: #{tpu_custom_call.1} parent=71 // pred_check_branch
          %612 = sbr.rel (%p610) target = $region88
        $region87: #{tpu_custom_call.1} parent=71 // pred_region
          %p613 = scmp.lt.s32.totalorder %s32, 1
          %s614 = scalar_select %p613, %s32, 1
          %s615 = smul.addr %s614, 8
          %s616 = scalar_lea.vmem %s3, %s615
        $region88: #{tpu_custom_call.1} parent=71 // pred_fallthru
          _
        // Predicated region
        $region89: #{tpu_custom_call.1} parent=71 // pred_check
          %p617 = pneg %p156
        $region90: #{tpu_custom_call.1} parent=71 // pred_check_branch
          %619 = sbr.rel (%p617) target = $region92
        $region91: #{tpu_custom_call.1} parent=71 // pred_region
          %p620 = scmp.lt.s32.totalorder %s32, 1
          %s621 = scalar_select %p620, %s32, 1
          %s622 = smul.addr %s621, 8
          %s623 = scalar_lea.vmem %s4, %s622
        $region92: #{tpu_custom_call.1} parent=71 // pred_fallthru
          _
      $region72: #{tpu_custom_call.1} parent=5 // pred_fallthru
        _
      %p624 = scmp.le.s32.totalorder 1, %s32
      %p625 = scmp.lt.s32.totalorder %s32, 3
      %p626 = pnand %p624, %p625
      %p627 = pneg %p626
      // Predicated region
      $region93: #{tpu_custom_call.1} parent=5 // pred_check
        _
      $region94: #{tpu_custom_call.1} parent=5 // pred_check_branch
        %629 = sbr.rel (%p626) target = $region96
      $region95: #{tpu_custom_call.1} parent=5 // pred_region
        %s630 = ssub.s32 %s32, 1
        // Predicated region
        $region97: #{tpu_custom_call.1} parent=95 // pred_check
          %p631 = pneg %p183
        $region98: #{tpu_custom_call.1} parent=95 // pred_check_branch
          %633 = sbr.rel (%p631) target = $region100
        $region99: #{tpu_custom_call.1} parent=95 // pred_region
          %634 = dma.done [#allocation3], 256
        $region100: #{tpu_custom_call.1} parent=95 // pred_fallthru
          _
        // Predicated region
        $region101: #{tpu_custom_call.1} parent=95 // pred_check
          %p635 = pneg %p204
        $region102: #{tpu_custom_call.1} parent=95 // pred_check_branch
          %637 = sbr.rel (%p635) target = $region104
        $region103: #{tpu_custom_call.1} parent=95 // pred_region
          %638 = dma.done [#allocation6], 256
        $region104: #{tpu_custom_call.1} parent=95 // pred_fallthru
          _
        %p639 = scmp.lt.s32.totalorder %s37, 1
        %s640 = scalar_select %p639, %s37, 1
        %s641 = smul.addr %s640, 8
        %s642 = scalar_lea.vmem %s0, %s641
        %p643 = pneg %p58
        %p644 = pneg %p55
        %p645 = scmp.lt.s32.totalorder %s37, 1
        %s646 = scalar_select %p645, %s37, 1
        %s647 = smul.addr %s646, 8
        %s648 = scalar_lea.vmem %s1, %s647
        %p649 = pneg %p84
        %p650 = pneg %p81
        %p651 = scmp.lt.s32.totalorder %s37, 1
        %s652 = scalar_select %p651, %s37, 1
        %s653 = smul.addr %s652, 8
        %s654 = scalar_lea.vmem %s2, %s653
        %p655 = pneg %p110
        %p656 = pneg %p107
        %p657 = scmp.lt.s32.totalorder %s37, 1
        %s658 = scalar_select %p657, %s37, 1
        %s659 = smul.addr %s658, 8
        %s660 = scalar_lea.vmem %s3, %s659
        %p661 = pneg %p136
        %p662 = pneg %p133
        %p663 = scmp.lt.s32.totalorder %s37, 1
        %s664 = scalar_select %p663, %s37, 1
        %s665 = smul.addr %s664, 8
        %s666 = scalar_lea.vmem %s4, %s665
        %p667 = pneg %p162
        %p668 = pneg %p159
        %p669 = pneg %p183
        %p670 = pneg %p180
        %p671 = pneg %p204
        %p672 = pneg %p201
        %p673 = pneg %p225
        %p674 = pneg %p222
        %p675 = pneg %p246
        %p676 = pneg %p243
        %p677 = pneg %p267
        %p678 = pneg %p264
        %p679 = pneg %p288
        %p680 = pneg %p285
        %p681 = pneg %p309
        %p682 = pneg %p306
        %p683 = pneg %p330
        %p684 = pneg %p327
        %p685 = pneg %p351
        %p686 = pneg %p348
        %p687 = pneg %p372
        %p688 = pneg %p369
        %p689 = pneg %p393
        %p690 = pneg %p390
        %p691 = pneg %p414
        %p692 = pneg %p411
        %p693 = pneg %p435
        %p694 = pneg %p432
        %p695 = pneg %p456
        %p696 = pneg %p453
        %p697 = pneg %p482
        %p698 = pneg %p479
        %s699 = sand.u32 %s469, 1
        %s700 = scalar_lea.sflag [#allocation4], %s699
        %s701 = sand.u32 %s469, 1
        %s702 = smul.addr %s701, 8
        %s703 = scalar_lea.vmem [#allocation7], %s702
        %p704 = pneg %p508
        %p705 = pneg %p505
        %p706 = scmp.lt.s32.totalorder %s37, 1
        %s707 = scalar_select %p706, %s37, 1
        %s708 = smul.addr %s707, 8
        %s709 = scalar_lea.vmem %s20, %s708
        %p710 = scmp.lt.s32.totalorder %s37, 1
        %s711 = scalar_select %p710, %s37, 1
        %s712 = smul.addr %s711, 8
        %s713 = scalar_lea.vmem %s0, %s712
        %p714 = scmp.lt.s32.totalorder %s37, 1
        %s715 = scalar_select %p714, %s37, 1
        %s716 = smul.addr %s715, 8
        %s717 = scalar_lea.vmem %s1, %s716
        %p718 = scmp.lt.s32.totalorder %s37, 1
        %s719 = scalar_select %p718, %s37, 1
        %s720 = smul.addr %s719, 8
        %s721 = scalar_lea.vmem %s2, %s720
        %p722 = scmp.lt.s32.totalorder %s37, 1
        %s723 = scalar_select %p722, %s37, 1
        %s724 = smul.addr %s723, 8
        %s725 = scalar_lea.vmem %s3, %s724
        %p726 = scmp.lt.s32.totalorder %s37, 1
        %s727 = scalar_select %p726, %s37, 1
        %s728 = smul.addr %s727, 8
        %s729 = scalar_lea.vmem %s4, %s728
        %p730 = scmp.lt.s32.totalorder %s37, 1
        %s731 = scalar_select %p730, %s37, 1
        %s732 = smul.addr %s731, 8
        %s733 = scalar_lea.vmem %s20, %s732
        %v734 = vld [vmem:[%s713] sm:$0xff]
        %v735 = vlaneseq
        %v736 = vand.u32 %v735, 127
        %737 = vset.pattern.permute.xlu0 0
        %738 = vperm.xlu0 %737, %v734
        %v739 = vpop.permute.xlu0 %738
        %vm740 = vcmp.eq.s32.totalorder %v736, %v739
        %v741 = vsel %vm740, 1, 0
        %v742 = vcvt.s32.f32 %v741
        %v743 = vld [vmem:[#allocation2] sm:$0xff]
        %v744 = vld [vmem:[#allocation2 + $0x8] sm:$0xff]
        %vm745 = vcmask 130048
        %v747 = vsel %vm745, %v742, 0
        %749 = vmatprep.subr.mxu0 0.0
        %750 = vmatpush1.msra.mxu0 0.0
        %751 = vmatprep.subr.mxu0 0.0
        %752 = vmatpush1.msra.mxu0 0.0
        %753 = vmatprep.subr.mxu0 0.0
        %754 = vmatpush1.msra.mxu0 0.0
        %755 = vmatprep.subr.mxu0 0.0
        %756 = vmatpush1.msra.mxu0 0.0
        %757 = vmatprep.subr.mxu0 0.0
        %758 = vmatpush1.msra.mxu0 0.0
        %759 = vmatprep.subr.mxu0 0.0
        %760 = vmatpush1.msra.mxu0 0.0
        %761 = vmatprep.subr.mxu0 0.0
        %762 = vmatpush1.msra.mxu0 0.0
        %763 = vmatprep.subr.mxu0 0.0
        %764 = vmatpush1.msra.mxu0 0.0
        %765 = vmatprep.subr.mxu0 0.0
        %766 = vmatpush1.msra.mxu0 0.0
        %767 = vmatprep.subr.mxu0 0.0
        %768 = vmatpush1.msra.mxu0 0.0
        %769 = vmatprep.subr.mxu0 0.0
        %770 = vmatpush1.msra.mxu0 0.0
        %771 = vmatprep.subr.mxu0 0.0
        %772 = vmatpush1.msra.mxu0 0.0
        %773 = vmatprep.subr.mxu0 0.0
        %774 = vmatpush1.msra.mxu0 0.0
        %775 = vmatprep.subr.mxu0 0.0
        %776 = vmatpush1.msra.mxu0 0.0
        %777 = vmatprep.subr.mxu0 0.0
        %778 = vmatpush1.msra.mxu0 %v744
        %779 = vmatprep.subr.mxu0 0.0
        %780 = vmatpush1.msra.mxu0 %v743
        %781 = vmatprep.subr.mxu0 0.0
        %782 = vmatpush2.msra.mxu0 0.0
        %783 = vmatprep.subr.mxu0 0.0
        %784 = vmatpush2.msra.mxu0 0.0
        %785 = vmatprep.subr.mxu0 0.0
        %786 = vmatpush2.msra.mxu0 0.0
        %787 = vmatprep.subr.mxu0 0.0
        %788 = vmatpush2.msra.mxu0 0.0
        %789 = vmatprep.subr.mxu0 0.0
        %790 = vmatpush2.msra.mxu0 0.0
        %791 = vmatprep.subr.mxu0 0.0
        %792 = vmatpush2.msra.mxu0 0.0
        %793 = vmatprep.subr.mxu0 0.0
        %794 = vmatpush2.msra.mxu0 0.0
        %795 = vmatprep.subr.mxu0 0.0
        %796 = vmatpush2.msra.mxu0 0.0
        %797 = vmatprep.subr.mxu0 0.0
        %798 = vmatpush2.msra.mxu0 0.0
        %799 = vmatprep.subr.mxu0 0.0
        %800 = vmatpush2.msra.mxu0 0.0
        %801 = vmatprep.subr.mxu0 0.0
        %802 = vmatpush2.msra.mxu0 0.0
        %803 = vmatprep.subr.mxu0 0.0
        %804 = vmatpush2.msra.mxu0 0.0
        %805 = vmatprep.subr.mxu0 0.0
        %806 = vmatpush2.msra.mxu0 0.0
        %807 = vmatprep.subr.mxu0 0.0
        %808 = vmatpush2.msra.mxu0 0.0
        %809 = vmatprep.subr.mxu0 0.0
        %810 = vmatpush2.msra.mxu0 0.0
        %811 = vmatprep.subr.mxu0 0.0
        %812 = vmatpush2.msra.mxu0 0.0
        %813 = vmatprep.mubr.f32.mxu0 0.0
        %814 = vmatmul.mubr.f32.gmra.mxu0 %v747
        %v815 = vpop.f32.mrf.mxu0
        %v816 = vadd.f32 0.0, %v815
        %v817 = vpop.f32.mrf.mxu0
        %818 = vdwg.mxu0
        %v819 = vld [vmem:[%s717] sm:$0xff]
        %820 = vset.pattern.permute.xlu0 0
        %821 = vperm.xlu0 %820, %v819
        %v822 = vpop.permute.xlu0 %821
        %vm823 = vcmp.eq.s32.totalorder %v736, %v822
        %v824 = vsel %vm823, 1, 0
        %v825 = vcvt.s32.f32 %v824
        %v826 = vld [vmem:[#allocation5] sm:$0xff]
        %v827 = vld [vmem:[#allocation5 + $0x8] sm:$0xff]
        %v829 = vsel %vm745, %v825, 0
        %831 = vmatprep.subr.mxu0 0.0
        %832 = vmatpush1.msra.mxu0 0.0
        %833 = vmatprep.subr.mxu0 0.0
        %834 = vmatpush1.msra.mxu0 0.0
        %835 = vmatprep.subr.mxu0 0.0
        %836 = vmatpush1.msra.mxu0 0.0
        %837 = vmatprep.subr.mxu0 0.0
        %838 = vmatpush1.msra.mxu0 0.0
        %839 = vmatprep.subr.mxu0 0.0
        %840 = vmatpush1.msra.mxu0 0.0
        %841 = vmatprep.subr.mxu0 0.0
        %842 = vmatpush1.msra.mxu0 0.0
        %843 = vmatprep.subr.mxu0 0.0
        %844 = vmatpush1.msra.mxu0 0.0
        %845 = vmatprep.subr.mxu0 0.0
        %846 = vmatpush1.msra.mxu0 0.0
        %847 = vmatprep.subr.mxu0 0.0
        %848 = vmatpush1.msra.mxu0 0.0
        %849 = vmatprep.subr.mxu0 0.0
        %850 = vmatpush1.msra.mxu0 0.0
        %851 = vmatprep.subr.mxu0 0.0
        %852 = vmatpush1.msra.mxu0 0.0
        %853 = vmatprep.subr.mxu0 0.0
        %854 = vmatpush1.msra.mxu0 0.0
        %855 = vmatprep.subr.mxu0 0.0
        %856 = vmatpush1.msra.mxu0 0.0
        %857 = vmatprep.subr.mxu0 0.0
        %858 = vmatpush1.msra.mxu0 0.0
        %859 = vmatprep.subr.mxu0 0.0
        %860 = vmatpush1.msra.mxu0 %v827
        %861 = vmatprep.subr.mxu0 0.0
        %862 = vmatpush1.msra.mxu0 %v826
        %863 = vmatprep.subr.mxu0 0.0
        %864 = vmatpush2.msra.mxu0 0.0
        %865 = vmatprep.subr.mxu0 0.0
        %866 = vmatpush2.msra.mxu0 0.0
        %867 = vmatprep.subr.mxu0 0.0
        %868 = vmatpush2.msra.mxu0 0.0
        %869 = vmatprep.subr.mxu0 0.0
        %870 = vmatpush2.msra.mxu0 0.0
        %871 = vmatprep.subr.mxu0 0.0
        %872 = vmatpush2.msra.mxu0 0.0
        %873 = vmatprep.subr.mxu0 0.0
        %874 = vmatpush2.msra.mxu0 0.0
        %875 = vmatprep.subr.mxu0 0.0
        %876 = vmatpush2.msra.mxu0 0.0
        %877 = vmatprep.subr.mxu0 0.0
        %878 = vmatpush2.msra.mxu0 0.0
        %879 = vmatprep.subr.mxu0 0.0
        %880 = vmatpush2.msra.mxu0 0.0
        %881 = vmatprep.subr.mxu0 0.0
        %882 = vmatpush2.msra.mxu0 0.0
        %883 = vmatprep.subr.mxu0 0.0
        %884 = vmatpush2.msra.mxu0 0.0
        %885 = vmatprep.subr.mxu0 0.0
        %886 = vmatpush2.msra.mxu0 0.0
        %887 = vmatprep.subr.mxu0 0.0
        %888 = vmatpush2.msra.mxu0 0.0
        %889 = vmatprep.subr.mxu0 0.0
        %890 = vmatpush2.msra.mxu0 0.0
        %891 = vmatprep.subr.mxu0 0.0
        %892 = vmatpush2.msra.mxu0 0.0
        %893 = vmatprep.subr.mxu0 0.0
        %894 = vmatpush2.msra.mxu0 0.0
        %895 = vmatprep.mubr.f32.mxu0 0.0
        %896 = vmatmul.mubr.f32.gmra.mxu0 %v829
        %v897 = vpop.f32.mrf.mxu0
        %v898 = vadd.f32 0.0, %v897
        %v899 = vpop.f32.mrf.mxu0
        %900 = vdwg.mxu0
        %v901 = vld [vmem:[%s721] sm:$0xff]
        %902 = vset.pattern.permute.xlu0 0
        %903 = vperm.xlu0 %902, %v901
        %v904 = vpop.permute.xlu0 %903
        %vm905 = vcmp.eq.s32.totalorder %v736, %v904
        %v906 = vsel %vm905, 1, 0
        %v907 = vcvt.s32.f32 %v906
        %v908 = vld [vmem:[%s7] sm:$0xff]
        %v909 = vld [vmem:[%s7 + $0x8] sm:$0xff]
        %v910 = vld [vmem:[%s7 + $0x10] sm:$0xff]
        %vm911 = vcmask 195584
        %v913 = vsel %vm911, %v907, 0
        %915 = vmatprep.subr.mxu0 0.0
        %916 = vmatpush1.msra.mxu0 0.0
        %917 = vmatprep.subr.mxu0 0.0
        %918 = vmatpush1.msra.mxu0 0.0
        %919 = vmatprep.subr.mxu0 0.0
        %920 = vmatpush1.msra.mxu0 0.0
        %921 = vmatprep.subr.mxu0 0.0
        %922 = vmatpush1.msra.mxu0 0.0
        %923 = vmatprep.subr.mxu0 0.0
        %924 = vmatpush1.msra.mxu0 0.0
        %925 = vmatprep.subr.mxu0 0.0
        %926 = vmatpush1.msra.mxu0 0.0
        %927 = vmatprep.subr.mxu0 0.0
        %928 = vmatpush1.msra.mxu0 0.0
        %929 = vmatprep.subr.mxu0 0.0
        %930 = vmatpush1.msra.mxu0 0.0
        %931 = vmatprep.subr.mxu0 0.0
        %932 = vmatpush1.msra.mxu0 0.0
        %933 = vmatprep.subr.mxu0 0.0
        %934 = vmatpush1.msra.mxu0 0.0
        %935 = vmatprep.subr.mxu0 0.0
        %936 = vmatpush1.msra.mxu0 0.0
        %937 = vmatprep.subr.mxu0 0.0
        %938 = vmatpush1.msra.mxu0 0.0
        %939 = vmatprep.subr.mxu0 0.0
        %940 = vmatpush1.msra.mxu0 0.0
        %941 = vmatprep.subr.mxu0 0.0
        %942 = vmatpush1.msra.mxu0 %v910
        %943 = vmatprep.subr.mxu0 0.0
        %944 = vmatpush1.msra.mxu0 %v909
        %945 = vmatprep.subr.mxu0 0.0
        %946 = vmatpush1.msra.mxu0 %v908
        %947 = vmatprep.subr.mxu0 0.0
        %948 = vmatpush2.msra.mxu0 0.0
        %949 = vmatprep.subr.mxu0 0.0
        %950 = vmatpush2.msra.mxu0 0.0
        %951 = vmatprep.subr.mxu0 0.0
        %952 = vmatpush2.msra.mxu0 0.0
        %953 = vmatprep.subr.mxu0 0.0
        %954 = vmatpush2.msra.mxu0 0.0
        %955 = vmatprep.subr.mxu0 0.0
        %956 = vmatpush2.msra.mxu0 0.0
        %957 = vmatprep.subr.mxu0 0.0
        %958 = vmatpush2.msra.mxu0 0.0
        %959 = vmatprep.subr.mxu0 0.0
        %960 = vmatpush2.msra.mxu0 0.0
        %961 = vmatprep.subr.mxu0 0.0
        %962 = vmatpush2.msra.mxu0 0.0
        %963 = vmatprep.subr.mxu0 0.0
        %964 = vmatpush2.msra.mxu0 0.0
        %965 = vmatprep.subr.mxu0 0.0
        %966 = vmatpush2.msra.mxu0 0.0
        %967 = vmatprep.subr.mxu0 0.0
        %968 = vmatpush2.msra.mxu0 0.0
        %969 = vmatprep.subr.mxu0 0.0
        %970 = vmatpush2.msra.mxu0 0.0
        %971 = vmatprep.subr.mxu0 0.0
        %972 = vmatpush2.msra.mxu0 0.0
        %973 = vmatprep.subr.mxu0 0.0
        %974 = vmatpush2.msra.mxu0 0.0
        %975 = vmatprep.subr.mxu0 0.0
        %976 = vmatpush2.msra.mxu0 0.0
        %977 = vmatprep.subr.mxu0 0.0
        %978 = vmatpush2.msra.mxu0 0.0
        %979 = vmatprep.mubr.f32.mxu0 0.0
        %980 = vmatmul.mubr.f32.gmra.mxu0 %v913
        %v981 = vpop.f32.mrf.mxu0
        %v982 = vadd.f32 0.0, %v981
        %v983 = vpop.f32.mrf.mxu0
        %984 = vdwg.mxu0
        %v985 = vld [vmem:[%s729] sm:$0xff]
        %986 = vset.pattern.permute.xlu0 0
        %987 = vperm.xlu0 %986, %v985
        %v988 = vpop.permute.xlu0 %987
        %vm989 = vcmp.eq.s32.totalorder %v736, %v988
        %v990 = vsel %vm989, 1, 0
        %v991 = vcvt.s32.f32 %v990
        %v993 = vsel %vm911, %v991, 0
        %995 = vmatprep.subr.mxu0 0.0
        %996 = vmatpush1.msra.mxu0 0.0
        %997 = vmatprep.subr.mxu0 0.0
        %998 = vmatpush1.msra.mxu0 0.0
        %999 = vmatprep.subr.mxu0 0.0
        %1000 = vmatpush1.msra.mxu0 0.0
        %1001 = vmatprep.subr.mxu0 0.0
        %1002 = vmatpush1.msra.mxu0 0.0
        %1003 = vmatprep.subr.mxu0 0.0
        %1004 = vmatpush1.msra.mxu0 0.0
        %1005 = vmatprep.subr.mxu0 0.0
        %1006 = vmatpush1.msra.mxu0 0.0
        %1007 = vmatprep.subr.mxu0 0.0
        %1008 = vmatpush1.msra.mxu0 0.0
        %1009 = vmatprep.subr.mxu0 0.0
        %1010 = vmatpush1.msra.mxu0 0.0
        %1011 = vmatprep.subr.mxu0 0.0
        %1012 = vmatpush1.msra.mxu0 0.0
        %1013 = vmatprep.subr.mxu0 0.0
        %1014 = vmatpush1.msra.mxu0 0.0
        %1015 = vmatprep.subr.mxu0 0.0
        %1016 = vmatpush1.msra.mxu0 0.0
        %1017 = vmatprep.subr.mxu0 0.0
        %1018 = vmatpush1.msra.mxu0 0.0
        %1019 = vmatprep.subr.mxu0 0.0
        %1020 = vmatpush1.msra.mxu0 0.0
        %1021 = vmatprep.subr.mxu0 0.0
        %1022 = vmatpush1.msra.mxu0 %v910
        %1023 = vmatprep.subr.mxu0 0.0
        %1024 = vmatpush1.msra.mxu0 %v909
        %1025 = vmatprep.subr.mxu0 0.0
        %1026 = vmatpush1.msra.mxu0 %v908
        %1027 = vmatprep.subr.mxu0 0.0
        %1028 = vmatpush2.msra.mxu0 0.0
        %1029 = vmatprep.subr.mxu0 0.0
        %1030 = vmatpush2.msra.mxu0 0.0
        %1031 = vmatprep.subr.mxu0 0.0
        %1032 = vmatpush2.msra.mxu0 0.0
        %1033 = vmatprep.subr.mxu0 0.0
        %1034 = vmatpush2.msra.mxu0 0.0
        %1035 = vmatprep.subr.mxu0 0.0
        %1036 = vmatpush2.msra.mxu0 0.0
        %1037 = vmatprep.subr.mxu0 0.0
        %1038 = vmatpush2.msra.mxu0 0.0
        %1039 = vmatprep.subr.mxu0 0.0
        %1040 = vmatpush2.msra.mxu0 0.0
        %1041 = vmatprep.subr.mxu0 0.0
        %1042 = vmatpush2.msra.mxu0 0.0
        %1043 = vmatprep.subr.mxu0 0.0
        %1044 = vmatpush2.msra.mxu0 0.0
        %1045 = vmatprep.subr.mxu0 0.0
        %1046 = vmatpush2.msra.mxu0 0.0
        %1047 = vmatprep.subr.mxu0 0.0
        %1048 = vmatpush2.msra.mxu0 0.0
        %1049 = vmatprep.subr.mxu0 0.0
        %1050 = vmatpush2.msra.mxu0 0.0
        %1051 = vmatprep.subr.mxu0 0.0
        %1052 = vmatpush2.msra.mxu0 0.0
        %1053 = vmatprep.subr.mxu0 0.0
        %1054 = vmatpush2.msra.mxu0 0.0
        %1055 = vmatprep.subr.mxu0 0.0
        %1056 = vmatpush2.msra.mxu0 0.0
        %1057 = vmatprep.subr.mxu0 0.0
        %1058 = vmatpush2.msra.mxu0 0.0
        %1059 = vmatprep.mubr.f32.mxu0 0.0
        %1060 = vmatmul.mubr.f32.gmra.mxu0 %v993
        %v1061 = vpop.f32.mrf.mxu0
        %v1062 = vadd.f32 0.0, %v1061
        %v1063 = vpop.f32.mrf.mxu0
        %1064 = vdwg.mxu0
        %v1065 = vld [vmem:[%s725] sm:$0xff]
        %1066 = vset.pattern.permute.xlu0 0
        %1067 = vperm.xlu0 %1066, %v1065
        %v1068 = vpop.permute.xlu0 %1067
        %vm1069 = vcmp.eq.s32.totalorder %v736, %v1068
        %v1070 = vsel %vm1069, 1, 0
        %v1071 = vcvt.s32.f32 %v1070
        %v1072 = vld [vmem:[%s8] sm:$0xff]
        %vm1073 = vcmask 64512
        %v1075 = vsel %vm1073, %v1071, 0
        %1077 = vmatprep.subr.mxu0 0.0
        %1078 = vmatpush1.msra.mxu0 0.0
        %1079 = vmatprep.subr.mxu0 0.0
        %1080 = vmatpush1.msra.mxu0 0.0
        %1081 = vmatprep.subr.mxu0 0.0
        %1082 = vmatpush1.msra.mxu0 0.0
        %1083 = vmatprep.subr.mxu0 0.0
        %1084 = vmatpush1.msra.mxu0 0.0
        %1085 = vmatprep.subr.mxu0 0.0
        %1086 = vmatpush1.msra.mxu0 0.0
        %1087 = vmatprep.subr.mxu0 0.0
        %1088 = vmatpush1.msra.mxu0 0.0
        %1089 = vmatprep.subr.mxu0 0.0
        %1090 = vmatpush1.msra.mxu0 0.0
        %1091 = vmatprep.subr.mxu0 0.0
        %1092 = vmatpush1.msra.mxu0 0.0
        %1093 = vmatprep.subr.mxu0 0.0
        %1094 = vmatpush1.msra.mxu0 0.0
        %1095 = vmatprep.subr.mxu0 0.0
        %1096 = vmatpush1.msra.mxu0 0.0
        %1097 = vmatprep.subr.mxu0 0.0
        %1098 = vmatpush1.msra.mxu0 0.0
        %1099 = vmatprep.subr.mxu0 0.0
        %1100 = vmatpush1.msra.mxu0 0.0
        %1101 = vmatprep.subr.mxu0 0.0
        %1102 = vmatpush1.msra.mxu0 0.0
        %1103 = vmatprep.subr.mxu0 0.0
        %1104 = vmatpush1.msra.mxu0 0.0
        %1105 = vmatprep.subr.mxu0 0.0
        %1106 = vmatpush1.msra.mxu0 0.0
        %1107 = vmatprep.subr.mxu0 0.0
        %1108 = vmatpush1.msra.mxu0 %v1072
        %1109 = vmatprep.subr.mxu0 0.0
        %1110 = vmatpush2.msra.mxu0 0.0
        %1111 = vmatprep.subr.mxu0 0.0
        %1112 = vmatpush2.msra.mxu0 0.0
        %1113 = vmatprep.subr.mxu0 0.0
        %1114 = vmatpush2.msra.mxu0 0.0
        %1115 = vmatprep.subr.mxu0 0.0
        %1116 = vmatpush2.msra.mxu0 0.0
        %1117 = vmatprep.subr.mxu0 0.0
        %1118 = vmatpush2.msra.mxu0 0.0
        %1119 = vmatprep.subr.mxu0 0.0
        %1120 = vmatpush2.msra.mxu0 0.0
        %1121 = vmatprep.subr.mxu0 0.0
        %1122 = vmatpush2.msra.mxu0 0.0
        %1123 = vmatprep.subr.mxu0 0.0
        %1124 = vmatpush2.msra.mxu0 0.0
        %1125 = vmatprep.subr.mxu0 0.0
        %1126 = vmatpush2.msra.mxu0 0.0
        %1127 = vmatprep.subr.mxu0 0.0
        %1128 = vmatpush2.msra.mxu0 0.0
        %1129 = vmatprep.subr.mxu0 0.0
        %1130 = vmatpush2.msra.mxu0 0.0
        %1131 = vmatprep.subr.mxu0 0.0
        %1132 = vmatpush2.msra.mxu0 0.0
        %1133 = vmatprep.subr.mxu0 0.0
        %1134 = vmatpush2.msra.mxu0 0.0
        %1135 = vmatprep.subr.mxu0 0.0
        %1136 = vmatpush2.msra.mxu0 0.0
        %1137 = vmatprep.subr.mxu0 0.0
        %1138 = vmatpush2.msra.mxu0 0.0
        %1139 = vmatprep.subr.mxu0 0.0
        %1140 = vmatpush2.msra.mxu0 0.0
        %1141 = vmatprep.mubr.f32.mxu0 0.0
        %1142 = vmatmul.mubr.f32.gmra.mxu0 %v1075
        %v1143 = vpop.f32.mrf.mxu0
        %v1144 = vadd.f32 0.0, %v1143
        %v1145 = vpop.f32.mrf.mxu0
        %1146 = vdwg.mxu0
        %v1147 = vld [vmem:[%s9] sm:$0xff]
        %v1148 = vld [vmem:[%s9 + $0x8] sm:$0xff]
        %v1149 = vld [vmem:[%s9 + $0x10] sm:$0xff]
        %v1150 = vld [vmem:[%s9 + $0x18] sm:$0xff]
        %v1151 = vld [vmem:[%s10] sm:$0x3]
        %vm1152 = vcmask 261120
        %v1154 = vsel %vm1152, %v982, 0
        %1156 = vmatprep.subr.mxu0 0.0
        %1157 = vmatpush1.msra.mxu0 0.0
        %1158 = vmatprep.subr.mxu0 0.0
        %1159 = vmatpush1.msra.mxu0 0.0
        %1160 = vmatprep.subr.mxu0 0.0
        %1161 = vmatpush1.msra.mxu0 0.0
        %1162 = vmatprep.subr.mxu0 0.0
        %1163 = vmatpush1.msra.mxu0 0.0
        %1164 = vmatprep.subr.mxu0 0.0
        %1165 = vmatpush1.msra.mxu0 0.0
        %1166 = vmatprep.subr.mxu0 0.0
        %1167 = vmatpush1.msra.mxu0 0.0
        %1168 = vmatprep.subr.mxu0 0.0
        %1169 = vmatpush1.msra.mxu0 0.0
        %1170 = vmatprep.subr.mxu0 0.0
        %1171 = vmatpush1.msra.mxu0 0.0
        %1172 = vmatprep.subr.mxu0 0.0
        %1173 = vmatpush1.msra.mxu0 0.0
        %1174 = vmatprep.subr.mxu0 0.0
        %1175 = vmatpush1.msra.mxu0 0.0
        %1176 = vmatprep.subr.mxu0 0.0
        %1177 = vmatpush1.msra.mxu0 0.0
        %1178 = vmatprep.subr.mxu0 0.0
        %1179 = vmatpush1.msra.mxu0 0.0
        %1180 = vmatprep.subr.mxu0 0.0
        %1181 = vmatpush1.msra.mxu0 %v1150
        %1182 = vmatprep.subr.mxu0 0.0
        %1183 = vmatpush1.msra.mxu0 %v1149
        %1184 = vmatprep.subr.mxu0 0.0
        %1185 = vmatpush1.msra.mxu0 %v1148
        %1186 = vmatprep.subr.mxu0 0.0
        %1187 = vmatpush1.msra.mxu0 %v1147
        %1188 = vmatprep.subr.mxu0 0.0
        %1189 = vmatpush2.msra.mxu0 0.0
        %1190 = vmatprep.subr.mxu0 0.0
        %1191 = vmatpush2.msra.mxu0 0.0
        %1192 = vmatprep.subr.mxu0 0.0
        %1193 = vmatpush2.msra.mxu0 0.0
        %1194 = vmatprep.subr.mxu0 0.0
        %1195 = vmatpush2.msra.mxu0 0.0
        %1196 = vmatprep.subr.mxu0 0.0
        %1197 = vmatpush2.msra.mxu0 0.0
        %1198 = vmatprep.subr.mxu0 0.0
        %1199 = vmatpush2.msra.mxu0 0.0
        %1200 = vmatprep.subr.mxu0 0.0
        %1201 = vmatpush2.msra.mxu0 0.0
        %1202 = vmatprep.subr.mxu0 0.0
        %1203 = vmatpush2.msra.mxu0 0.0
        %1204 = vmatprep.subr.mxu0 0.0
        %1205 = vmatpush2.msra.mxu0 0.0
        %1206 = vmatprep.subr.mxu0 0.0
        %1207 = vmatpush2.msra.mxu0 0.0
        %1208 = vmatprep.subr.mxu0 0.0
        %1209 = vmatpush2.msra.mxu0 0.0
        %1210 = vmatprep.subr.mxu0 0.0
        %1211 = vmatpush2.msra.mxu0 0.0
        %1212 = vmatprep.subr.mxu0 0.0
        %1213 = vmatpush2.msra.mxu0 0.0
        %1214 = vmatprep.subr.mxu0 0.0
        %1215 = vmatpush2.msra.mxu0 0.0
        %1216 = vmatprep.subr.mxu0 0.0
        %1217 = vmatpush2.msra.mxu0 0.0
        %1218 = vmatprep.subr.mxu0 0.0
        %1219 = vmatpush2.msra.mxu0 0.0
        %1220 = vmatprep.mubr.f32.mxu0 0.0
        %1221 = vmatmul.mubr.f32.gmra.mxu0 %v1154
        %v1222 = vpop.f32.mrf.mxu0
        %v1223 = vadd.f32 0.0, %v1222
        %v1224 = vpop.f32.mrf.mxu0
        %1225 = vdwg.mxu0
        %v1227 = vsel %vm1152, %v898, 0
        %1229 = vmatprep.subr.mxu0 0.0
        %1230 = vmatpush1.msra.mxu0 0.0
        %1231 = vmatprep.subr.mxu0 0.0
        %1232 = vmatpush1.msra.mxu0 0.0
        %1233 = vmatprep.subr.mxu0 0.0
        %1234 = vmatpush1.msra.mxu0 0.0
        %1235 = vmatprep.subr.mxu0 0.0
        %1236 = vmatpush1.msra.mxu0 0.0
        %1237 = vmatprep.subr.mxu0 0.0
        %1238 = vmatpush1.msra.mxu0 0.0
        %1239 = vmatprep.subr.mxu0 0.0
        %1240 = vmatpush1.msra.mxu0 0.0
        %1241 = vmatprep.subr.mxu0 0.0
        %1242 = vmatpush1.msra.mxu0 0.0
        %1243 = vmatprep.subr.mxu0 0.0
        %1244 = vmatpush1.msra.mxu0 0.0
        %1245 = vmatprep.subr.mxu0 0.0
        %1246 = vmatpush1.msra.mxu0 0.0
        %1247 = vmatprep.subr.mxu0 0.0
        %1248 = vmatpush1.msra.mxu0 0.0
        %1249 = vmatprep.subr.mxu0 0.0
        %1250 = vmatpush1.msra.mxu0 0.0
        %1251 = vmatprep.subr.mxu0 0.0
        %1252 = vmatpush1.msra.mxu0 0.0
        %1253 = vmatprep.subr.mxu0 0.0
        %1254 = vmatpush1.msra.mxu0 %v1150
        %1255 = vmatprep.subr.mxu0 0.0
        %1256 = vmatpush1.msra.mxu0 %v1149
        %1257 = vmatprep.subr.mxu0 0.0
        %1258 = vmatpush1.msra.mxu0 %v1148
        %1259 = vmatprep.subr.mxu0 0.0
        %1260 = vmatpush1.msra.mxu0 %v1147
        %1261 = vmatprep.subr.mxu0 0.0
        %1262 = vmatpush2.msra.mxu0 0.0
        %1263 = vmatprep.subr.mxu0 0.0
        %1264 = vmatpush2.msra.mxu0 0.0
        %1265 = vmatprep.subr.mxu0 0.0
        %1266 = vmatpush2.msra.mxu0 0.0
        %1267 = vmatprep.subr.mxu0 0.0
        %1268 = vmatpush2.msra.mxu0 0.0
        %1269 = vmatprep.subr.mxu0 0.0
        %1270 = vmatpush2.msra.mxu0 0.0
        %1271 = vmatprep.subr.mxu0 0.0
        %1272 = vmatpush2.msra.mxu0 0.0
        %1273 = vmatprep.subr.mxu0 0.0
        %1274 = vmatpush2.msra.mxu0 0.0
        %1275 = vmatprep.subr.mxu0 0.0
        %1276 = vmatpush2.msra.mxu0 0.0
        %1277 = vmatprep.subr.mxu0 0.0
        %1278 = vmatpush2.msra.mxu0 0.0
        %1279 = vmatprep.subr.mxu0 0.0
        %1280 = vmatpush2.msra.mxu0 0.0
        %1281 = vmatprep.subr.mxu0 0.0
        %1282 = vmatpush2.msra.mxu0 0.0
        %1283 = vmatprep.subr.mxu0 0.0
        %1284 = vmatpush2.msra.mxu0 0.0
        %1285 = vmatprep.subr.mxu0 0.0
        %1286 = vmatpush2.msra.mxu0 0.0
        %1287 = vmatprep.subr.mxu0 0.0
        %1288 = vmatpush2.msra.mxu0 0.0
        %1289 = vmatprep.subr.mxu0 0.0
        %1290 = vmatpush2.msra.mxu0 0.0
        %1291 = vmatprep.subr.mxu0 0.0
        %1292 = vmatpush2.msra.mxu0 0.0
        %1293 = vmatprep.mubr.f32.mxu0 0.0
        %1294 = vmatmul.mubr.f32.gmra.mxu0 %v1227
        %v1295 = vpop.f32.mrf.mxu0
        %v1296 = vadd.f32 0.0, %v1295
        %v1297 = vpop.f32.mrf.mxu0
        %1298 = vdwg.mxu0
        %1300 = vset.pattern.permute.xlu0 0
        %1301 = vperm.xlu0 %1300, %v1223
        %v1302 = vpop.permute.xlu0 %1301
        %v1304 = vmul.f32 %v898, %v1302
        %1306 = vset.pattern.permute.xlu0 1
        %1307 = vperm.xlu0 %1306, %v1296
        %v1308 = vpop.permute.xlu0 %1307
        %v1310 = vmul.f32 %v982, %v1308
        %v1311 = vadd.f32 %v1304, %v1310
        %v1312 = vlaneseq
        %v1313 = vshrl.u32 %v1312, 7
        %v1314 = vsub.s32 0, %v1313
        %v1315 = vrot.slane %v1151, %v1314
        %v1316 = vadd.f32 %v1311, %v1315
        %1317 = vset.pattern.permute.xlu0 2
        %1318 = vperm.xlu0 %1317, %v1223
        %v1319 = vpop.permute.xlu0 %1318
        %v1321 = vmul.f32 %v898, %v1319
        %1322 = vset.pattern.permute.xlu0 3
        %1323 = vperm.xlu0 %1322, %v1296
        %v1324 = vpop.permute.xlu0 %1323
        %v1326 = vmul.f32 %v982, %v1324
        %v1327 = vadd.f32 %v1321, %v1326
        %v1328 = vlaneseq
        %v1329 = vshrl.u32 %v1328, 7
        %v1330 = vsub.s32 1, %v1329
        %v1331 = vrot.slane %v1151, %v1330
        %v1332 = vadd.f32 %v1327, %v1331
        %v1333 = vld [vmem:[%s11] sm:$0xff]
        %v1334 = vld [vmem:[%s11 + $0x8] sm:$0xff]
        %v1335 = vld [vmem:[%s11 + $0x10] sm:$0xff]
        %v1336 = vld [vmem:[%s11 + $0x18] sm:$0xff]
        %v1337 = vld [vmem:[%s12] sm:$0x1]
        %v1339 = vlaneseq
        %v1340 = vshrl.u32 %v1339, 7
        %v1341 = vsub.s32 0, %v1340
        %v1342 = vrot.slane %v1337, %v1341
        %v1345 = vsel %vm1152, %v816, 0
        %1347 = vmatprep.subr.mxu0 0.0
        %1348 = vmatpush1.msra.mxu0 0.0
        %1349 = vmatprep.subr.mxu0 0.0
        %1350 = vmatpush1.msra.mxu0 0.0
        %1351 = vmatprep.subr.mxu0 0.0
        %1352 = vmatpush1.msra.mxu0 0.0
        %1353 = vmatprep.subr.mxu0 0.0
        %1354 = vmatpush1.msra.mxu0 0.0
        %1355 = vmatprep.subr.mxu0 0.0
        %1356 = vmatpush1.msra.mxu0 0.0
        %1357 = vmatprep.subr.mxu0 0.0
        %1358 = vmatpush1.msra.mxu0 0.0
        %1359 = vmatprep.subr.mxu0 0.0
        %1360 = vmatpush1.msra.mxu0 0.0
        %1361 = vmatprep.subr.mxu0 0.0
        %1362 = vmatpush1.msra.mxu0 0.0
        %1363 = vmatprep.subr.mxu0 0.0
        %1364 = vmatpush1.msra.mxu0 0.0
        %1365 = vmatprep.subr.mxu0 0.0
        %1366 = vmatpush1.msra.mxu0 0.0
        %1367 = vmatprep.subr.mxu0 0.0
        %1368 = vmatpush1.msra.mxu0 0.0
        %1369 = vmatprep.subr.mxu0 0.0
        %1370 = vmatpush1.msra.mxu0 0.0
        %1371 = vmatprep.subr.mxu0 0.0
        %1372 = vmatpush1.msra.mxu0 %v1336
        %1373 = vmatprep.subr.mxu0 0.0
        %1374 = vmatpush1.msra.mxu0 %v1335
        %1375 = vmatprep.subr.mxu0 0.0
        %1376 = vmatpush1.msra.mxu0 %v1334
        %1377 = vmatprep.subr.mxu0 0.0
        %1378 = vmatpush1.msra.mxu0 %v1333
        %1379 = vmatprep.subr.mxu0 0.0
        %1380 = vmatpush2.msra.mxu0 0.0
        %1381 = vmatprep.subr.mxu0 0.0
        %1382 = vmatpush2.msra.mxu0 0.0
        %1383 = vmatprep.subr.mxu0 0.0
        %1384 = vmatpush2.msra.mxu0 0.0
        %1385 = vmatprep.subr.mxu0 0.0
        %1386 = vmatpush2.msra.mxu0 0.0
        %1387 = vmatprep.subr.mxu0 0.0
        %1388 = vmatpush2.msra.mxu0 0.0
        %1389 = vmatprep.subr.mxu0 0.0
        %1390 = vmatpush2.msra.mxu0 0.0
        %1391 = vmatprep.subr.mxu0 0.0
        %1392 = vmatpush2.msra.mxu0 0.0
        %1393 = vmatprep.subr.mxu0 0.0
        %1394 = vmatpush2.msra.mxu0 0.0
        %1395 = vmatprep.subr.mxu0 0.0
        %1396 = vmatpush2.msra.mxu0 0.0
        %1397 = vmatprep.subr.mxu0 0.0
        %1398 = vmatpush2.msra.mxu0 0.0
        %1399 = vmatprep.subr.mxu0 0.0
        %1400 = vmatpush2.msra.mxu0 0.0
        %1401 = vmatprep.subr.mxu0 0.0
        %1402 = vmatpush2.msra.mxu0 0.0
        %1403 = vmatprep.subr.mxu0 0.0
        %1404 = vmatpush2.msra.mxu0 0.0
        %1405 = vmatprep.subr.mxu0 0.0
        %1406 = vmatpush2.msra.mxu0 0.0
        %1407 = vmatprep.subr.mxu0 0.0
        %1408 = vmatpush2.msra.mxu0 0.0
        %1409 = vmatprep.subr.mxu0 0.0
        %1410 = vmatpush2.msra.mxu0 0.0
        %1411 = vmatprep.mubr.f32.mxu0 0.0
        %1412 = vmatmul.mubr.f32.gmra.mxu0 %v1345
        %v1413 = vpop.f32.mrf.mxu0
        %v1414 = vadd.f32 %v1342, %v1413
        %v1415 = vpop.f32.mrf.mxu0
        %1416 = vdwg.mxu0
        %v1417 = vmax.f32 %v1414, 0.0
        %v1418 = vld [vmem:[%s13] sm:$0xff]
        %v1419 = vld [vmem:[%s13 + $0x8] sm:$0xff]
        %v1420 = vld [vmem:[%s13 + $0x10] sm:$0xff]
        %v1421 = vld [vmem:[%s13 + $0x18] sm:$0xff]
        %v1422 = vld [vmem:[%s14] sm:$0x1]
        %v1424 = vlaneseq
        %v1425 = vshrl.u32 %v1424, 7
        %v1426 = vsub.s32 0, %v1425
        %v1427 = vrot.slane %v1422, %v1426
        %v1430 = vsel %vm1152, %v1062, 0
        %1432 = vmatprep.subr.mxu0 0.0
        %1433 = vmatpush1.msra.mxu0 0.0
        %1434 = vmatprep.subr.mxu0 0.0
        %1435 = vmatpush1.msra.mxu0 0.0
        %1436 = vmatprep.subr.mxu0 0.0
        %1437 = vmatpush1.msra.mxu0 0.0
        %1438 = vmatprep.subr.mxu0 0.0
        %1439 = vmatpush1.msra.mxu0 0.0
        %1440 = vmatprep.subr.mxu0 0.0
        %1441 = vmatpush1.msra.mxu0 0.0
        %1442 = vmatprep.subr.mxu0 0.0
        %1443 = vmatpush1.msra.mxu0 0.0
        %1444 = vmatprep.subr.mxu0 0.0
        %1445 = vmatpush1.msra.mxu0 0.0
        %1446 = vmatprep.subr.mxu0 0.0
        %1447 = vmatpush1.msra.mxu0 0.0
        %1448 = vmatprep.subr.mxu0 0.0
        %1449 = vmatpush1.msra.mxu0 0.0
        %1450 = vmatprep.subr.mxu0 0.0
        %1451 = vmatpush1.msra.mxu0 0.0
        %1452 = vmatprep.subr.mxu0 0.0
        %1453 = vmatpush1.msra.mxu0 0.0
        %1454 = vmatprep.subr.mxu0 0.0
        %1455 = vmatpush1.msra.mxu0 0.0
        %1456 = vmatprep.subr.mxu0 0.0
        %1457 = vmatpush1.msra.mxu0 %v1421
        %1458 = vmatprep.subr.mxu0 0.0
        %1459 = vmatpush1.msra.mxu0 %v1420
        %1460 = vmatprep.subr.mxu0 0.0
        %1461 = vmatpush1.msra.mxu0 %v1419
        %1462 = vmatprep.subr.mxu0 0.0
        %1463 = vmatpush1.msra.mxu0 %v1418
        %1464 = vmatprep.subr.mxu0 0.0
        %1465 = vmatpush2.msra.mxu0 0.0
        %1466 = vmatprep.subr.mxu0 0.0
        %1467 = vmatpush2.msra.mxu0 0.0
        %1468 = vmatprep.subr.mxu0 0.0
        %1469 = vmatpush2.msra.mxu0 0.0
        %1470 = vmatprep.subr.mxu0 0.0
        %1471 = vmatpush2.msra.mxu0 0.0
        %1472 = vmatprep.subr.mxu0 0.0
        %1473 = vmatpush2.msra.mxu0 0.0
        %1474 = vmatprep.subr.mxu0 0.0
        %1475 = vmatpush2.msra.mxu0 0.0
        %1476 = vmatprep.subr.mxu0 0.0
        %1477 = vmatpush2.msra.mxu0 0.0
        %1478 = vmatprep.subr.mxu0 0.0
        %1479 = vmatpush2.msra.mxu0 0.0
        %1480 = vmatprep.subr.mxu0 0.0
        %1481 = vmatpush2.msra.mxu0 0.0
        %1482 = vmatprep.subr.mxu0 0.0
        %1483 = vmatpush2.msra.mxu0 0.0
        %1484 = vmatprep.subr.mxu0 0.0
        %1485 = vmatpush2.msra.mxu0 0.0
        %1486 = vmatprep.subr.mxu0 0.0
        %1487 = vmatpush2.msra.mxu0 0.0
        %1488 = vmatprep.subr.mxu0 0.0
        %1489 = vmatpush2.msra.mxu0 0.0
        %1490 = vmatprep.subr.mxu0 0.0
        %1491 = vmatpush2.msra.mxu0 0.0
        %1492 = vmatprep.subr.mxu0 0.0
        %1493 = vmatpush2.msra.mxu0 0.0
        %1494 = vmatprep.subr.mxu0 0.0
        %1495 = vmatpush2.msra.mxu0 0.0
        %1496 = vmatprep.mubr.f32.mxu0 0.0
        %1497 = vmatmul.mubr.f32.gmra.mxu0 %v1430
        %v1498 = vpop.f32.mrf.mxu0
        %v1499 = vadd.f32 %v1427, %v1498
        %v1500 = vpop.f32.mrf.mxu0
        %1501 = vdwg.mxu0
        %v1502 = vmax.f32 %v1499, 0.0
        %s1503 = scalar_lea.vmem %s9, 32
        %v1504 = vld [vmem:[%s1503] sm:$0xff]
        %v1505 = vld [vmem:[%s1503 + $0x8] sm:$0xff]
        %v1506 = vld [vmem:[%s1503 + $0x10] sm:$0xff]
        %v1507 = vld [vmem:[%s1503 + $0x18] sm:$0xff]
        %s1508 = scalar_lea.vmem %s10, 2
        %v1509 = vld [vmem:[%s1508] sm:$0x3]
        %v1511 = vsel %vm1152, %v1332, 0
        %1513 = vmatprep.subr.mxu0 0.0
        %1514 = vmatpush1.msra.mxu0 0.0
        %1515 = vmatprep.subr.mxu0 0.0
        %1516 = vmatpush1.msra.mxu0 0.0
        %1517 = vmatprep.subr.mxu0 0.0
        %1518 = vmatpush1.msra.mxu0 0.0
        %1519 = vmatprep.subr.mxu0 0.0
        %1520 = vmatpush1.msra.mxu0 0.0
        %1521 = vmatprep.subr.mxu0 0.0
        %1522 = vmatpush1.msra.mxu0 0.0
        %1523 = vmatprep.subr.mxu0 0.0
        %1524 = vmatpush1.msra.mxu0 0.0
        %1525 = vmatprep.subr.mxu0 0.0
        %1526 = vmatpush1.msra.mxu0 0.0
        %1527 = vmatprep.subr.mxu0 0.0
        %1528 = vmatpush1.msra.mxu0 0.0
        %1529 = vmatprep.subr.mxu0 0.0
        %1530 = vmatpush1.msra.mxu0 0.0
        %1531 = vmatprep.subr.mxu0 0.0
        %1532 = vmatpush1.msra.mxu0 0.0
        %1533 = vmatprep.subr.mxu0 0.0
        %1534 = vmatpush1.msra.mxu0 0.0
        %1535 = vmatprep.subr.mxu0 0.0
        %1536 = vmatpush1.msra.mxu0 0.0
        %1537 = vmatprep.subr.mxu0 0.0
        %1538 = vmatpush1.msra.mxu0 %v1507
        %1539 = vmatprep.subr.mxu0 0.0
        %1540 = vmatpush1.msra.mxu0 %v1506
        %1541 = vmatprep.subr.mxu0 0.0
        %1542 = vmatpush1.msra.mxu0 %v1505
        %1543 = vmatprep.subr.mxu0 0.0
        %1544 = vmatpush1.msra.mxu0 %v1504
        %1545 = vmatprep.subr.mxu0 0.0
        %1546 = vmatpush2.msra.mxu0 0.0
        %1547 = vmatprep.subr.mxu0 0.0
        %1548 = vmatpush2.msra.mxu0 0.0
        %1549 = vmatprep.subr.mxu0 0.0
        %1550 = vmatpush2.msra.mxu0 0.0
        %1551 = vmatprep.subr.mxu0 0.0
        %1552 = vmatpush2.msra.mxu0 0.0
        %1553 = vmatprep.subr.mxu0 0.0
        %1554 = vmatpush2.msra.mxu0 0.0
        %1555 = vmatprep.subr.mxu0 0.0
        %1556 = vmatpush2.msra.mxu0 0.0
        %1557 = vmatprep.subr.mxu0 0.0
        %1558 = vmatpush2.msra.mxu0 0.0
        %1559 = vmatprep.subr.mxu0 0.0
        %1560 = vmatpush2.msra.mxu0 0.0
        %1561 = vmatprep.subr.mxu0 0.0
        %1562 = vmatpush2.msra.mxu0 0.0
        %1563 = vmatprep.subr.mxu0 0.0
        %1564 = vmatpush2.msra.mxu0 0.0
        %1565 = vmatprep.subr.mxu0 0.0
        %1566 = vmatpush2.msra.mxu0 0.0
        %1567 = vmatprep.subr.mxu0 0.0
        %1568 = vmatpush2.msra.mxu0 0.0
        %1569 = vmatprep.subr.mxu0 0.0
        %1570 = vmatpush2.msra.mxu0 0.0
        %1571 = vmatprep.subr.mxu0 0.0
        %1572 = vmatpush2.msra.mxu0 0.0
        %1573 = vmatprep.subr.mxu0 0.0
        %1574 = vmatpush2.msra.mxu0 0.0
        %1575 = vmatprep.subr.mxu0 0.0
        %1576 = vmatpush2.msra.mxu0 0.0
        %1577 = vmatprep.mubr.f32.mxu0 0.0
        %1578 = vmatmul.mubr.f32.gmra.mxu0 %v1511
        %v1579 = vpop.f32.mrf.mxu0
        %v1580 = vadd.f32 0.0, %v1579
        %v1581 = vpop.f32.mrf.mxu0
        %1582 = vdwg.mxu0
        %v1584 = vsel %vm1152, %v1316, 0
        %1586 = vmatprep.subr.mxu0 0.0
        %1587 = vmatpush1.msra.mxu0 0.0
        %1588 = vmatprep.subr.mxu0 0.0
        %1589 = vmatpush1.msra.mxu0 0.0
        %1590 = vmatprep.subr.mxu0 0.0
        %1591 = vmatpush1.msra.mxu0 0.0
        %1592 = vmatprep.subr.mxu0 0.0
        %1593 = vmatpush1.msra.mxu0 0.0
        %1594 = vmatprep.subr.mxu0 0.0
        %1595 = vmatpush1.msra.mxu0 0.0
        %1596 = vmatprep.subr.mxu0 0.0
        %1597 = vmatpush1.msra.mxu0 0.0
        %1598 = vmatprep.subr.mxu0 0.0
        %1599 = vmatpush1.msra.mxu0 0.0
        %1600 = vmatprep.subr.mxu0 0.0
        %1601 = vmatpush1.msra.mxu0 0.0
        %1602 = vmatprep.subr.mxu0 0.0
        %1603 = vmatpush1.msra.mxu0 0.0
        %1604 = vmatprep.subr.mxu0 0.0
        %1605 = vmatpush1.msra.mxu0 0.0
        %1606 = vmatprep.subr.mxu0 0.0
        %1607 = vmatpush1.msra.mxu0 0.0
        %1608 = vmatprep.subr.mxu0 0.0
        %1609 = vmatpush1.msra.mxu0 0.0
        %1610 = vmatprep.subr.mxu0 0.0
        %1611 = vmatpush1.msra.mxu0 %v1507
        %1612 = vmatprep.subr.mxu0 0.0
        %1613 = vmatpush1.msra.mxu0 %v1506
        %1614 = vmatprep.subr.mxu0 0.0
        %1615 = vmatpush1.msra.mxu0 %v1505
        %1616 = vmatprep.subr.mxu0 0.0
        %1617 = vmatpush1.msra.mxu0 %v1504
        %1618 = vmatprep.subr.mxu0 0.0
        %1619 = vmatpush2.msra.mxu0 0.0
        %1620 = vmatprep.subr.mxu0 0.0
        %1621 = vmatpush2.msra.mxu0 0.0
        %1622 = vmatprep.subr.mxu0 0.0
        %1623 = vmatpush2.msra.mxu0 0.0
        %1624 = vmatprep.subr.mxu0 0.0
        %1625 = vmatpush2.msra.mxu0 0.0
        %1626 = vmatprep.subr.mxu0 0.0
        %1627 = vmatpush2.msra.mxu0 0.0
        %1628 = vmatprep.subr.mxu0 0.0
        %1629 = vmatpush2.msra.mxu0 0.0
        %1630 = vmatprep.subr.mxu0 0.0
        %1631 = vmatpush2.msra.mxu0 0.0
        %1632 = vmatprep.subr.mxu0 0.0
        %1633 = vmatpush2.msra.mxu0 0.0
        %1634 = vmatprep.subr.mxu0 0.0
        %1635 = vmatpush2.msra.mxu0 0.0
        %1636 = vmatprep.subr.mxu0 0.0
        %1637 = vmatpush2.msra.mxu0 0.0
        %1638 = vmatprep.subr.mxu0 0.0
        %1639 = vmatpush2.msra.mxu0 0.0
        %1640 = vmatprep.subr.mxu0 0.0
        %1641 = vmatpush2.msra.mxu0 0.0
        %1642 = vmatprep.subr.mxu0 0.0
        %1643 = vmatpush2.msra.mxu0 0.0
        %1644 = vmatprep.subr.mxu0 0.0
        %1645 = vmatpush2.msra.mxu0 0.0
        %1646 = vmatprep.subr.mxu0 0.0
        %1647 = vmatpush2.msra.mxu0 0.0
        %1648 = vmatprep.subr.mxu0 0.0
        %1649 = vmatpush2.msra.mxu0 0.0
        %1650 = vmatprep.mubr.f32.mxu0 0.0
        %1651 = vmatmul.mubr.f32.gmra.mxu0 %v1584
        %v1652 = vpop.f32.mrf.mxu0
        %v1653 = vadd.f32 0.0, %v1652
        %v1654 = vpop.f32.mrf.mxu0
        %1655 = vdwg.mxu0
        %1657 = vset.pattern.permute.xlu0 0
        %1658 = vperm.xlu0 %1657, %v1580
        %v1659 = vpop.permute.xlu0 %1658
        %v1661 = vmul.f32 %v1316, %v1659
        %1663 = vset.pattern.permute.xlu0 1
        %1664 = vperm.xlu0 %1663, %v1653
        %v1665 = vpop.permute.xlu0 %1664
        %v1667 = vmul.f32 %v1332, %v1665
        %v1668 = vadd.f32 %v1661, %v1667
        %v1669 = vlaneseq
        %v1670 = vshrl.u32 %v1669, 7
        %v1671 = vsub.s32 0, %v1670
        %v1672 = vrot.slane %v1509, %v1671
        %v1673 = vadd.f32 %v1668, %v1672
        %1674 = vset.pattern.permute.xlu0 2
        %1675 = vperm.xlu0 %1674, %v1580
        %v1676 = vpop.permute.xlu0 %1675
        %v1678 = vmul.f32 %v1316, %v1676
        %1679 = vset.pattern.permute.xlu0 3
        %1680 = vperm.xlu0 %1679, %v1653
        %v1681 = vpop.permute.xlu0 %1680
        %v1683 = vmul.f32 %v1332, %v1681
        %v1684 = vadd.f32 %v1678, %v1683
        %v1685 = vlaneseq
        %v1686 = vshrl.u32 %v1685, 7
        %v1687 = vsub.s32 1, %v1686
        %v1688 = vrot.slane %v1509, %v1687
        %v1689 = vadd.f32 %v1684, %v1688
        %s1690 = scalar_lea.vmem %s11, 32
        %v1691 = vld [vmem:[%s1690] sm:$0xff]
        %v1692 = vld [vmem:[%s1690 + $0x8] sm:$0xff]
        %v1693 = vld [vmem:[%s1690 + $0x10] sm:$0xff]
        %v1694 = vld [vmem:[%s1690 + $0x18] sm:$0xff]
        %s1695 = scalar_lea.vmem %s12, 1
        %v1696 = vld [vmem:[%s1695] sm:$0x1]
        %v1698 = vlaneseq
        %v1699 = vshrl.u32 %v1698, 7
        %v1700 = vsub.s32 0, %v1699
        %v1701 = vrot.slane %v1696, %v1700
        %v1704 = vsel %vm1152, %v1417, 0
        %1706 = vmatprep.subr.mxu0 0.0
        %1707 = vmatpush1.msra.mxu0 0.0
        %1708 = vmatprep.subr.mxu0 0.0
        %1709 = vmatpush1.msra.mxu0 0.0
        %1710 = vmatprep.subr.mxu0 0.0
        %1711 = vmatpush1.msra.mxu0 0.0
        %1712 = vmatprep.subr.mxu0 0.0
        %1713 = vmatpush1.msra.mxu0 0.0
        %1714 = vmatprep.subr.mxu0 0.0
        %1715 = vmatpush1.msra.mxu0 0.0
        %1716 = vmatprep.subr.mxu0 0.0
        %1717 = vmatpush1.msra.mxu0 0.0
        %1718 = vmatprep.subr.mxu0 0.0
        %1719 = vmatpush1.msra.mxu0 0.0
        %1720 = vmatprep.subr.mxu0 0.0
        %1721 = vmatpush1.msra.mxu0 0.0
        %1722 = vmatprep.subr.mxu0 0.0
        %1723 = vmatpush1.msra.mxu0 0.0
        %1724 = vmatprep.subr.mxu0 0.0
        %1725 = vmatpush1.msra.mxu0 0.0
        %1726 = vmatprep.subr.mxu0 0.0
        %1727 = vmatpush1.msra.mxu0 0.0
        %1728 = vmatprep.subr.mxu0 0.0
        %1729 = vmatpush1.msra.mxu0 0.0
        %1730 = vmatprep.subr.mxu0 0.0
        %1731 = vmatpush1.msra.mxu0 %v1694
        %1732 = vmatprep.subr.mxu0 0.0
        %1733 = vmatpush1.msra.mxu0 %v1693
        %1734 = vmatprep.subr.mxu0 0.0
        %1735 = vmatpush1.msra.mxu0 %v1692
        %1736 = vmatprep.subr.mxu0 0.0
        %1737 = vmatpush1.msra.mxu0 %v1691
        %1738 = vmatprep.subr.mxu0 0.0
        %1739 = vmatpush2.msra.mxu0 0.0
        %1740 = vmatprep.subr.mxu0 0.0
        %1741 = vmatpush2.msra.mxu0 0.0
        %1742 = vmatprep.subr.mxu0 0.0
        %1743 = vmatpush2.msra.mxu0 0.0
        %1744 = vmatprep.subr.mxu0 0.0
        %1745 = vmatpush2.msra.mxu0 0.0
        %1746 = vmatprep.subr.mxu0 0.0
        %1747 = vmatpush2.msra.mxu0 0.0
        %1748 = vmatprep.subr.mxu0 0.0
        %1749 = vmatpush2.msra.mxu0 0.0
        %1750 = vmatprep.subr.mxu0 0.0
        %1751 = vmatpush2.msra.mxu0 0.0
        %1752 = vmatprep.subr.mxu0 0.0
        %1753 = vmatpush2.msra.mxu0 0.0
        %1754 = vmatprep.subr.mxu0 0.0
        %1755 = vmatpush2.msra.mxu0 0.0
        %1756 = vmatprep.subr.mxu0 0.0
        %1757 = vmatpush2.msra.mxu0 0.0
        %1758 = vmatprep.subr.mxu0 0.0
        %1759 = vmatpush2.msra.mxu0 0.0
        %1760 = vmatprep.subr.mxu0 0.0
        %1761 = vmatpush2.msra.mxu0 0.0
        %1762 = vmatprep.subr.mxu0 0.0
        %1763 = vmatpush2.msra.mxu0 0.0
        %1764 = vmatprep.subr.mxu0 0.0
        %1765 = vmatpush2.msra.mxu0 0.0
        %1766 = vmatprep.subr.mxu0 0.0
        %1767 = vmatpush2.msra.mxu0 0.0
        %1768 = vmatprep.subr.mxu0 0.0
        %1769 = vmatpush2.msra.mxu0 0.0
        %1770 = vmatprep.mubr.f32.mxu0 0.0
        %1771 = vmatmul.mubr.f32.gmra.mxu0 %v1704
        %v1772 = vpop.f32.mrf.mxu0
        %v1773 = vadd.f32 %v1701, %v1772
        %v1774 = vpop.f32.mrf.mxu0
        %1775 = vdwg.mxu0
        %v1776 = vmax.f32 %v1773, 0.0
        %s1777 = scalar_lea.vmem %s13, 32
        %v1778 = vld [vmem:[%s1777] sm:$0xff]
        %v1779 = vld [vmem:[%s1777 + $0x8] sm:$0xff]
        %v1780 = vld [vmem:[%s1777 + $0x10] sm:$0xff]
        %v1781 = vld [vmem:[%s1777 + $0x18] sm:$0xff]
        %s1782 = scalar_lea.vmem %s14, 1
        %v1783 = vld [vmem:[%s1782] sm:$0x1]
        %v1785 = vlaneseq
        %v1786 = vshrl.u32 %v1785, 7
        %v1787 = vsub.s32 0, %v1786
        %v1788 = vrot.slane %v1783, %v1787
        %v1791 = vsel %vm1152, %v1502, 0
        %1793 = vmatprep.subr.mxu0 0.0
        %1794 = vmatpush1.msra.mxu0 0.0
        %1795 = vmatprep.subr.mxu0 0.0
        %1796 = vmatpush1.msra.mxu0 0.0
        %1797 = vmatprep.subr.mxu0 0.0
        %1798 = vmatpush1.msra.mxu0 0.0
        %1799 = vmatprep.subr.mxu0 0.0
        %1800 = vmatpush1.msra.mxu0 0.0
        %1801 = vmatprep.subr.mxu0 0.0
        %1802 = vmatpush1.msra.mxu0 0.0
        %1803 = vmatprep.subr.mxu0 0.0
        %1804 = vmatpush1.msra.mxu0 0.0
        %1805 = vmatprep.subr.mxu0 0.0
        %1806 = vmatpush1.msra.mxu0 0.0
        %1807 = vmatprep.subr.mxu0 0.0
        %1808 = vmatpush1.msra.mxu0 0.0
        %1809 = vmatprep.subr.mxu0 0.0
        %1810 = vmatpush1.msra.mxu0 0.0
        %1811 = vmatprep.subr.mxu0 0.0
        %1812 = vmatpush1.msra.mxu0 0.0
        %1813 = vmatprep.subr.mxu0 0.0
        %1814 = vmatpush1.msra.mxu0 0.0
        %1815 = vmatprep.subr.mxu0 0.0
        %1816 = vmatpush1.msra.mxu0 0.0
        %1817 = vmatprep.subr.mxu0 0.0
        %1818 = vmatpush1.msra.mxu0 %v1781
        %1819 = vmatprep.subr.mxu0 0.0
        %1820 = vmatpush1.msra.mxu0 %v1780
        %1821 = vmatprep.subr.mxu0 0.0
        %1822 = vmatpush1.msra.mxu0 %v1779
        %1823 = vmatprep.subr.mxu0 0.0
        %1824 = vmatpush1.msra.mxu0 %v1778
        %1825 = vmatprep.subr.mxu0 0.0
        %1826 = vmatpush2.msra.mxu0 0.0
        %1827 = vmatprep.subr.mxu0 0.0
        %1828 = vmatpush2.msra.mxu0 0.0
        %1829 = vmatprep.subr.mxu0 0.0
        %1830 = vmatpush2.msra.mxu0 0.0
        %1831 = vmatprep.subr.mxu0 0.0
        %1832 = vmatpush2.msra.mxu0 0.0
        %1833 = vmatprep.subr.mxu0 0.0
        %1834 = vmatpush2.msra.mxu0 0.0
        %1835 = vmatprep.subr.mxu0 0.0
        %1836 = vmatpush2.msra.mxu0 0.0
        %1837 = vmatprep.subr.mxu0 0.0
        %1838 = vmatpush2.msra.mxu0 0.0
        %1839 = vmatprep.subr.mxu0 0.0
        %1840 = vmatpush2.msra.mxu0 0.0
        %1841 = vmatprep.subr.mxu0 0.0
        %1842 = vmatpush2.msra.mxu0 0.0
        %1843 = vmatprep.subr.mxu0 0.0
        %1844 = vmatpush2.msra.mxu0 0.0
        %1845 = vmatprep.subr.mxu0 0.0
        %1846 = vmatpush2.msra.mxu0 0.0
        %1847 = vmatprep.subr.mxu0 0.0
        %1848 = vmatpush2.msra.mxu0 0.0
        %1849 = vmatprep.subr.mxu0 0.0
        %1850 = vmatpush2.msra.mxu0 0.0
        %1851 = vmatprep.subr.mxu0 0.0
        %1852 = vmatpush2.msra.mxu0 0.0
        %1853 = vmatprep.subr.mxu0 0.0
        %1854 = vmatpush2.msra.mxu0 0.0
        %1855 = vmatprep.subr.mxu0 0.0
        %1856 = vmatpush2.msra.mxu0 0.0
        %1857 = vmatprep.mubr.f32.mxu0 0.0
        %1858 = vmatmul.mubr.f32.gmra.mxu0 %v1791
        %v1859 = vpop.f32.mrf.mxu0
        %v1860 = vadd.f32 %v1788, %v1859
        %v1861 = vpop.f32.mrf.mxu0
        %1862 = vdwg.mxu0
        %v1863 = vmax.f32 %v1860, 0.0
        %v1864 = vmul.f32 %v1776, %v1673
        %v1865 = vsel %vm1152, %v1864, 0.0
        %1866 = vadd.xlane.f32.xlu0 %v1865
        %v1867 = vpop.xlane.xlu0 %1866
        %v1868 = vxor.u32 %v1867, 2147483648
        %v1869 = vmul.f32 %v1868, 1.442695
        %v1870 = vpow.pop %v1869
        %v1871 = vadd.f32 %v1870, 1.0
        %v1872 = vrcp.pop %v1871
        %v1873 = vmul.f32 1.0, %v1872
        %v1874 = vld [vmem:[%s15] sm:$0xff]
        %v1875 = vld [vmem:[%s15 + $0x8] sm:$0xff]
        %v1876 = vld [vmem:[%s15 + $0x10] sm:$0xff]
        %v1877 = vld [vmem:[%s15 + $0x18] sm:$0xff]
        %v1878 = vld [vmem:[%s15 + $0x20] sm:$0xff]
        %v1879 = vld [vmem:[%s15 + $0x28] sm:$0xff]
        %v1880 = vld [vmem:[%s15 + $0x30] sm:$0xff]
        %v1881 = vld [vmem:[%s15 + $0x38] sm:$0xff]
        %v1882 = vld [vmem:[%s16] sm:$0x1]
        %v1884 = vsel %vm1152, %v1144, 0
        %1886 = vmatprep.subr.mxu0 0.0
        %1887 = vmatpush1.msra.mxu0 0.0
        %1888 = vmatprep.subr.mxu0 0.0
        %1889 = vmatpush1.msra.mxu0 0.0
        %1890 = vmatprep.subr.mxu0 0.0
        %1891 = vmatpush1.msra.mxu0 0.0
        %1892 = vmatprep.subr.mxu0 0.0
        %1893 = vmatpush1.msra.mxu0 0.0
        %1894 = vmatprep.subr.mxu0 0.0
        %1895 = vmatpush1.msra.mxu0 0.0
        %1896 = vmatprep.subr.mxu0 0.0
        %1897 = vmatpush1.msra.mxu0 0.0
        %1898 = vmatprep.subr.mxu0 0.0
        %1899 = vmatpush1.msra.mxu0 0.0
        %1900 = vmatprep.subr.mxu0 0.0
        %1901 = vmatpush1.msra.mxu0 0.0
        %1902 = vmatprep.subr.mxu0 0.0
        %1903 = vmatpush1.msra.mxu0 0.0
        %1904 = vmatprep.subr.mxu0 0.0
        %1905 = vmatpush1.msra.mxu0 0.0
        %1906 = vmatprep.subr.mxu0 0.0
        %1907 = vmatpush1.msra.mxu0 0.0
        %1908 = vmatprep.subr.mxu0 0.0
        %1909 = vmatpush1.msra.mxu0 0.0
        %1910 = vmatprep.subr.mxu0 0.0
        %1911 = vmatpush1.msra.mxu0 %v1881
        %1912 = vmatprep.subr.mxu0 0.0
        %1913 = vmatpush1.msra.mxu0 %v1880
        %1914 = vmatprep.subr.mxu0 0.0
        %1915 = vmatpush1.msra.mxu0 %v1879
        %1916 = vmatprep.subr.mxu0 0.0
        %1917 = vmatpush1.msra.mxu0 %v1878
        %1918 = vmatprep.subr.mxu0 0.0
        %1919 = vmatpush2.msra.mxu0 0.0
        %1920 = vmatprep.subr.mxu0 0.0
        %1921 = vmatpush2.msra.mxu0 0.0
        %1922 = vmatprep.subr.mxu0 0.0
        %1923 = vmatpush2.msra.mxu0 0.0
        %1924 = vmatprep.subr.mxu0 0.0
        %1925 = vmatpush2.msra.mxu0 0.0
        %1926 = vmatprep.subr.mxu0 0.0
        %1927 = vmatpush2.msra.mxu0 0.0
        %1928 = vmatprep.subr.mxu0 0.0
        %1929 = vmatpush2.msra.mxu0 0.0
        %1930 = vmatprep.subr.mxu0 0.0
        %1931 = vmatpush2.msra.mxu0 0.0
        %1932 = vmatprep.subr.mxu0 0.0
        %1933 = vmatpush2.msra.mxu0 0.0
        %1934 = vmatprep.subr.mxu0 0.0
        %1935 = vmatpush2.msra.mxu0 0.0
        %1936 = vmatprep.subr.mxu0 0.0
        %1937 = vmatpush2.msra.mxu0 0.0
        %1938 = vmatprep.subr.mxu0 0.0
        %1939 = vmatpush2.msra.mxu0 0.0
        %1940 = vmatprep.subr.mxu0 0.0
        %1941 = vmatpush2.msra.mxu0 0.0
        %1942 = vmatprep.subr.mxu0 0.0
        %1943 = vmatpush2.msra.mxu0 0.0
        %1944 = vmatprep.subr.mxu0 0.0
        %1945 = vmatpush2.msra.mxu0 0.0
        %1946 = vmatprep.subr.mxu0 0.0
        %1947 = vmatpush2.msra.mxu0 0.0
        %1948 = vmatprep.subr.mxu0 0.0
        %1949 = vmatpush2.msra.mxu0 0.0
        %1950 = vmatprep.mubr.f32.mxu0 0.0
        %1951 = vmatmul.mubr.f32.gmra.mxu0 %v1884
        %v1952 = vpop.f32.mrf.mxu0
        %v1953 = vadd.f32 0.0, %v1952
        %v1954 = vpop.f32.mrf.mxu0
        %1955 = vdwg.mxu0
        %v1957 = vsel %vm1152, %v1689, 0
        %1959 = vmatprep.subr.mxu0 0.0
        %1960 = vmatpush1.msra.mxu0 0.0
        %1961 = vmatprep.subr.mxu0 0.0
        %1962 = vmatpush1.msra.mxu0 0.0
        %1963 = vmatprep.subr.mxu0 0.0
        %1964 = vmatpush1.msra.mxu0 0.0
        %1965 = vmatprep.subr.mxu0 0.0
        %1966 = vmatpush1.msra.mxu0 0.0
        %1967 = vmatprep.subr.mxu0 0.0
        %1968 = vmatpush1.msra.mxu0 0.0
        %1969 = vmatprep.subr.mxu0 0.0
        %1970 = vmatpush1.msra.mxu0 0.0
        %1971 = vmatprep.subr.mxu0 0.0
        %1972 = vmatpush1.msra.mxu0 0.0
        %1973 = vmatprep.subr.mxu0 0.0
        %1974 = vmatpush1.msra.mxu0 0.0
        %1975 = vmatprep.subr.mxu0 0.0
        %1976 = vmatpush1.msra.mxu0 0.0
        %1977 = vmatprep.subr.mxu0 0.0
        %1978 = vmatpush1.msra.mxu0 0.0
        %1979 = vmatprep.subr.mxu0 0.0
        %1980 = vmatpush1.msra.mxu0 0.0
        %1981 = vmatprep.subr.mxu0 0.0
        %1982 = vmatpush1.msra.mxu0 0.0
        %1983 = vmatprep.subr.mxu0 0.0
        %1984 = vmatpush1.msra.mxu0 %v1877
        %1985 = vmatprep.subr.mxu0 0.0
        %1986 = vmatpush1.msra.mxu0 %v1876
        %1987 = vmatprep.subr.mxu0 0.0
        %1988 = vmatpush1.msra.mxu0 %v1875
        %1989 = vmatprep.subr.mxu0 0.0
        %1990 = vmatpush1.msra.mxu0 %v1874
        %1991 = vmatprep.subr.mxu0 0.0
        %1992 = vmatpush2.msra.mxu0 0.0
        %1993 = vmatprep.subr.mxu0 0.0
        %1994 = vmatpush2.msra.mxu0 0.0
        %1995 = vmatprep.subr.mxu0 0.0
        %1996 = vmatpush2.msra.mxu0 0.0
        %1997 = vmatprep.subr.mxu0 0.0
        %1998 = vmatpush2.msra.mxu0 0.0
        %1999 = vmatprep.subr.mxu0 0.0
        %2000 = vmatpush2.msra.mxu0 0.0
        %2001 = vmatprep.subr.mxu0 0.0
        %2002 = vmatpush2.msra.mxu0 0.0
        %2003 = vmatprep.subr.mxu0 0.0
        %2004 = vmatpush2.msra.mxu0 0.0
        %2005 = vmatprep.subr.mxu0 0.0
        %2006 = vmatpush2.msra.mxu0 0.0
        %2007 = vmatprep.subr.mxu0 0.0
        %2008 = vmatpush2.msra.mxu0 0.0
        %2009 = vmatprep.subr.mxu0 0.0
        %2010 = vmatpush2.msra.mxu0 0.0
        %2011 = vmatprep.subr.mxu0 0.0
        %2012 = vmatpush2.msra.mxu0 0.0
        %2013 = vmatprep.subr.mxu0 0.0
        %2014 = vmatpush2.msra.mxu0 0.0
        %2015 = vmatprep.subr.mxu0 0.0
        %2016 = vmatpush2.msra.mxu0 0.0
        %2017 = vmatprep.subr.mxu0 0.0
        %2018 = vmatpush2.msra.mxu0 0.0
        %2019 = vmatprep.subr.mxu0 0.0
        %2020 = vmatpush2.msra.mxu0 0.0
        %2021 = vmatprep.subr.mxu0 0.0
        %2022 = vmatpush2.msra.mxu0 0.0
        %2023 = vmatprep.mubr.f32.mxu0 0.0
        %2024 = vmatmul.mubr.f32.gmra.mxu0 %v1957
        %v2025 = vpop.f32.mrf.mxu0
        %v2026 = vadd.f32 %v1953, %v2025
        %v2027 = vpop.f32.mrf.mxu0
        %2028 = vdwg.mxu0
        %v2030 = vlaneseq
        %v2031 = vshrl.u32 %v2030, 7
        %v2032 = vsub.s32 0, %v2031
        %v2033 = vrot.slane %v1882, %v2032
        %v2035 = vadd.f32 %v2026, %v2033
        %v2036 = vmax.f32 %v2035, 0.0
        %v2037 = vld [vmem:[%s17] sm:$0xff]
        %v2038 = vld [vmem:[%s17 + $0x8] sm:$0xff]
        %v2039 = vld [vmem:[%s17 + $0x10] sm:$0xff]
        %v2040 = vld [vmem:[%s17 + $0x18] sm:$0xff]
        %v2041 = vld [vmem:[%s17 + $0x20] sm:$0xff]
        %v2042 = vld [vmem:[%s17 + $0x28] sm:$0xff]
        %v2043 = vld [vmem:[%s17 + $0x30] sm:$0xff]
        %v2044 = vld [vmem:[%s17 + $0x38] sm:$0xff]
        %v2045 = vld [vmem:[%s18] sm:$0x1]
        %v2047 = vlaneseq
        %v2048 = vshrl.u32 %v2047, 7
        %v2049 = vsub.s32 0, %v2048
        %v2050 = vrot.slane %v2045, %v2049
        %vm2052 = vcmask 523264
        %v2054 = vsel %vm2052, %v2036, 0
        %2056 = vmatprep.subr.mxu0 0.0
        %2057 = vmatpush1.msra.mxu0 0.0
        %2058 = vmatprep.subr.mxu0 0.0
        %2059 = vmatpush1.msra.mxu0 0.0
        %2060 = vmatprep.subr.mxu0 0.0
        %2061 = vmatpush1.msra.mxu0 0.0
        %2062 = vmatprep.subr.mxu0 0.0
        %2063 = vmatpush1.msra.mxu0 0.0
        %2064 = vmatprep.subr.mxu0 0.0
        %2065 = vmatpush1.msra.mxu0 0.0
        %2066 = vmatprep.subr.mxu0 0.0
        %2067 = vmatpush1.msra.mxu0 0.0
        %2068 = vmatprep.subr.mxu0 0.0
        %2069 = vmatpush1.msra.mxu0 0.0
        %2070 = vmatprep.subr.mxu0 0.0
        %2071 = vmatpush1.msra.mxu0 0.0
        %2072 = vmatprep.subr.mxu0 0.0
        %2073 = vmatpush1.msra.mxu0 %v2044
        %2074 = vmatprep.subr.mxu0 0.0
        %2075 = vmatpush1.msra.mxu0 %v2043
        %2076 = vmatprep.subr.mxu0 0.0
        %2077 = vmatpush1.msra.mxu0 %v2042
        %2078 = vmatprep.subr.mxu0 0.0
        %2079 = vmatpush1.msra.mxu0 %v2041
        %2080 = vmatprep.subr.mxu0 0.0
        %2081 = vmatpush1.msra.mxu0 %v2040
        %2082 = vmatprep.subr.mxu0 0.0
        %2083 = vmatpush1.msra.mxu0 %v2039
        %2084 = vmatprep.subr.mxu0 0.0
        %2085 = vmatpush1.msra.mxu0 %v2038
        %2086 = vmatprep.subr.mxu0 0.0
        %2087 = vmatpush1.msra.mxu0 %v2037
        %2088 = vmatprep.subr.mxu0 0.0
        %2089 = vmatpush2.msra.mxu0 0.0
        %2090 = vmatprep.subr.mxu0 0.0
        %2091 = vmatpush2.msra.mxu0 0.0
        %2092 = vmatprep.subr.mxu0 0.0
        %2093 = vmatpush2.msra.mxu0 0.0
        %2094 = vmatprep.subr.mxu0 0.0
        %2095 = vmatpush2.msra.mxu0 0.0
        %2096 = vmatprep.subr.mxu0 0.0
        %2097 = vmatpush2.msra.mxu0 0.0
        %2098 = vmatprep.subr.mxu0 0.0
        %2099 = vmatpush2.msra.mxu0 0.0
        %2100 = vmatprep.subr.mxu0 0.0
        %2101 = vmatpush2.msra.mxu0 0.0
        %2102 = vmatprep.subr.mxu0 0.0
        %2103 = vmatpush2.msra.mxu0 0.0
        %2104 = vmatprep.subr.mxu0 0.0
        %2105 = vmatpush2.msra.mxu0 0.0
        %2106 = vmatprep.subr.mxu0 0.0
        %2107 = vmatpush2.msra.mxu0 0.0
        %2108 = vmatprep.subr.mxu0 0.0
        %2109 = vmatpush2.msra.mxu0 0.0
        %2110 = vmatprep.subr.mxu0 0.0
        %2111 = vmatpush2.msra.mxu0 0.0
        %2112 = vmatprep.subr.mxu0 0.0
        %2113 = vmatpush2.msra.mxu0 0.0
        %2114 = vmatprep.subr.mxu0 0.0
        %2115 = vmatpush2.msra.mxu0 0.0
        %2116 = vmatprep.subr.mxu0 0.0
        %2117 = vmatpush2.msra.mxu0 0.0
        %2118 = vmatprep.subr.mxu0 0.0
        %2119 = vmatpush2.msra.mxu0 0.0
        %2120 = vmatprep.mubr.f32.mxu0 0.0
        %2121 = vmatmul.mubr.f32.gmra.mxu0 %v2054
        %v2122 = vpop.f32.mrf.mxu0
        %v2123 = vadd.f32 %v2050, %v2122
        %v2124 = vpop.f32.mrf.mxu0
        %2125 = vdwg.mxu0
        %v2126 = vmax.f32 %v2123, 0.0
        %v2127 = vxor.u32 %v2126, 2147483648
        %v2128 = vmul.f32 %v2127, 1.442695
        %v2129 = vpow.pop %v2128
        %v2130 = vadd.f32 %v2129, 1.0
        %v2131 = vrcp.pop %v2130
        %v2132 = vmul.f32 1.0, %v2131
        %v2133 = vmul.f32 %v1863, %v2132
        %v2134 = vsel %vm1152, %v2133, 0.0
        %2135 = vadd.xlane.f32.xlu0 %v2134
        %v2136 = vpop.xlane.xlu0 %2135
        %v2137 = vxor.u32 %v2136, 2147483648
        %v2138 = vmul.f32 %v2137, 1.442695
        %v2139 = vpow.pop %v2138
        %v2140 = vadd.f32 %v2139, 1.0
        %v2141 = vrcp.pop %v2140
        %v2142 = vmul.f32 1.0, %v2141
        %v2143 = vsub.f32 %v1863, %v2132
        %v2144 = vmul.f32 %v2143, %v2143
        %v2145 = vsel %vm1152, %v2144, 0.0
        %2146 = vadd.xlane.f32.xlu0 %v2145
        %v2147 = vpop.xlane.xlu0 %2146
        %v2148 = vrcp.pop 32.0
        %v2149 = vmul.f32 %v2147, %v2148
        %v2150 = vrsqrt.pop %v2149
        %v2151 = vmul.f32 %v2149, %v2150
        %vm2152 = vcmp.eq.f32.partialorder %v2149, inf
        %v2153 = vsel %vm2152, %v2149, %v2151
        %vm2154 = vcmp.eq.f32.partialorder %v2149, 0.0
        %v2155 = vand.u32 %v2149, 2147483648
        %v2156 = vsel %vm2154, %v2155, %v2153
        %2158 = vrot.lane.b32.xlu0 %v1673, 32
        %v2159 = vpop.permute.xlu0 %2158
        %2161 = vrot.lane.b32.xlu0 %v1689, 64
        %v2162 = vpop.permute.xlu0 %2161
        %2165 = vrot.lane.b32.xlu0 %v1863, 96
        %v2166 = vpop.permute.xlu0 %2165
        %v2168 = vsel %vm1152, %v1776, %v2159
        %v2169 = vsel %vm2052, %v2168, %v2162
        %vm2170 = vcmask 785408
        %v2171 = vsel %vm2170, %v2169, %v2166
        %2172 = vst [vmem:[%s703] sm:$0xff] %v2171
        %vm2173 = vcmp.eq.s32.totalorder %v736, 0
        %v2174 = vsel %vm2173, %v1867, 0.0
        %vm2175 = vcmp.eq.s32.totalorder %v736, 1
        %v2176 = vsel %vm2175, %v1873, 0.0
        %v2177 = vadd.f32 %v2174, %v2176
        %vm2178 = vcmp.eq.s32.totalorder %v736, 2
        %v2179 = vsel %vm2178, %v2142, 0.0
        %v2180 = vadd.f32 %v2177, %v2179
        %vm2181 = vcmp.eq.s32.totalorder %v736, 3
        %v2182 = vsel %vm2181, %v2156, 0.0
        %v2183 = vadd.f32 %v2180, %v2182
        %2184 = vst.msk [vmem:[%s733] sm:$0xff] %vm1073, %v2183
        %s2185 = sand.u32 %s469, 1
        %s2186 = scalar_lea.sflag [#allocation4], %s2185
        %s2187 = sand.u32 %s469, 1
        %s2188 = smul.addr %s2187, 8
        %s2189 = scalar_lea.vmem [#allocation7], %s2188
        %p2190 = scmp.lt.s32.totalorder %s37, 1
        %s2191 = scalar_select %p2190, %s37, 1
        %s2192 = smul.addr %s2191, 8
        %s2193 = scalar_lea.vmem %s20, %s2192
        // Predicated region
        $region105: #{tpu_custom_call.1} parent=95 // pred_check
          %p2194 = pneg %p479
        $region106: #{tpu_custom_call.1} parent=95 // pred_check_branch
          %2196 = sbr.rel (%p2194) target = $region108
        $region107: #{tpu_custom_call.1} parent=95 // pred_region
          %s2198 = ssub.s32 128, 128
          %2199 = vsyncadd %s2186, %s2198
          %s2200 = smul.addr %s37, 128
          %s2201 = scalar_lea.hbm %s19, %s2200
          %s2203 = sshll.u32 %s2189, 4
          %s2204 = int_to_ptr.vmem [resolvable:$true] %s2203
          %2206 = dma.vmem_to_hbm [thread:$0]  %s2204, 128, %s2201, %s2186
        $region108: #{tpu_custom_call.1} parent=95 // pred_fallthru
          _
        // Predicated region
        $region109: #{tpu_custom_call.1} parent=95 // pred_check
          %p2207 = pneg %p505
        $region110: #{tpu_custom_call.1} parent=95 // pred_check_branch
          %2209 = sbr.rel (%p2207) target = $region112
        $region111: #{tpu_custom_call.1} parent=95 // pred_region
          _
        $region112: #{tpu_custom_call.1} parent=95 // pred_fallthru
          _
      $region96: #{tpu_custom_call.1} parent=5 // pred_fallthru
        _
      %p2210 = scmp.le.s32.totalorder 2, %s32
      // Predicated region
      $region113: #{tpu_custom_call.1} parent=5 // pred_check
        %p2211 = pneg %p2210
      $region114: #{tpu_custom_call.1} parent=5 // pred_check_branch
        %2213 = sbr.rel (%p2211) target = $region116
      $region115: #{tpu_custom_call.1} parent=5 // pred_region
        %s2214 = ssub.s32 %s32, 2
        // Predicated region
        $region117: #{tpu_custom_call.1} parent=115 // pred_check
          %p2215 = pneg %p485
        $region118: #{tpu_custom_call.1} parent=115 // pred_check_branch
          %2217 = sbr.rel (%p2215) target = $region120
        $region119: #{tpu_custom_call.1} parent=115 // pred_region
          %s2218 = sand.u32 %s470, 1
          %s2219 = scalar_lea.sflag [#allocation4], %s2218
          %s2220 = sand.u32 %s470, 1
          %s2221 = smul.addr %s2220, 8
          %s2222 = scalar_lea.vmem [#allocation7], %s2221
          %2223 = dma.done %s2219, 128
        $region120: #{tpu_custom_call.1} parent=115 // pred_fallthru
          _
        // Predicated region
        $region121: #{tpu_custom_call.1} parent=115 // pred_check
          %p2224 = pneg %p511
        $region122: #{tpu_custom_call.1} parent=115 // pred_check_branch
          %2226 = sbr.rel (%p2224) target = $region124
        $region123: #{tpu_custom_call.1} parent=115 // pred_region
          %p2227 = scmp.lt.s32.totalorder %s38, 1
          %s2228 = scalar_select %p2227, %s38, 1
          %s2229 = smul.addr %s2228, 8
          %s2230 = scalar_lea.vmem %s20, %s2229
        $region124: #{tpu_custom_call.1} parent=115 // pred_fallthru
          _
      $region116: #{tpu_custom_call.1} parent=5 // pred_fallthru
        _
    $region6: #{tpu_custom_call.1} parent=1 // loop_footer
      %s36 = sadd.s32 1, %s32
    $region7: #{tpu_custom_call.1} parent=1 // loop_footer_branch
      %31 = sbr.rel target = $region3
    $region8: #{tpu_custom_call.1} parent=1 // loop_exit
      _
    %2231 = vsyncpa [#allocation3], 1
    %s2232 = scalar_lea.sflag [#allocation3], 1
    %2233 = vsyncpa %s2232, 1
    %2234 = vsyncpa [#allocation6], 1
    %2235 = vsyncpa [#allocation4], 1
    %s2236 = scalar_lea.sflag [#allocation4], 1
    %2237 = vsyncpa %s2236, 1

</llo_original>
